<compile_context>
chip_gen: v5e
topology: v5e:2x2
jax: 0.10.0
libtpu: 0.0.40
codegen_flags: <defaults>
</compile_context>

<pallas_src>
import functools

import jax
import jax.numpy as jnp
from jax.experimental import pallas as pl
from jax.experimental.pallas import tpu as pltpu


# ----------------------------- fused Pallas kernel -------------------------- #

def _bottleneck_kernel(x_ref, w1_ref, b1_ref, w2_ref, b2_ref, w3_ref, b3_ref,
                       o_ref, ypad_ref, *, H, W, pad, bt):
    """batch_tile images: conv1+bn1+relu -> conv2(3x3)+bn2+relu -> conv3+bn3+res+relu.

    x_ref   : (bt, H*W, Cin)        lane-dense activation slabs
    w1_ref  : (Cin, P)              conv1 weight * bn1 scale
    w2_ref  : (3, 3P, P)            conv2 weight * bn2 scale, one (3P, P) block per dy,
                                    rows ordered (dx=-1 | dx=0 | dx=+1) x input-channel
    w3_ref  : (P, Cout)             conv3 weight * bn3 scale
    b*_ref  : (1, C)                folded BN biases (f32)
    o_ref   : (bt, H*W, Cout)
    ypad_ref: (H*W + 2*pad, 3P)     VMEM scratch with a zero vertical halo
    """
    M = H * W
    P = w1_ref.shape[1]
    Cin = x_ref.shape[2]
    Cout = o_ref.shape[2]
    S = ypad_ref.shape[0]                        # M + 2*pad
    cdtype = ypad_ref.dtype

    # Zero ONLY the halo rows (data rows [pad, pad+M) are fully rewritten for
    # every image).  Both stores are 8-row aligned (pad % 8 == 0, M % 8 == 0).
    ypad_ref[pl.ds(0, pad), :] = jnp.zeros((pad, 3 * P), cdtype)
    ypad_ref[pl.ds(pad + M, pad), :] = jnp.zeros((pad, 3 * P), cdtype)

    # Column masks for the horizontal taps -- built once, reused for every image
    # (hoisted so the (M, P) broadcast is not re-materialized per tap).
    col = jax.lax.broadcasted_iota(jnp.int32, (M, P), 0) % W
    m_not_last = (col != W - 1).astype(jnp.float32)   # kills dx=-1 row wrap
    m_not_first = (col != 0).astype(jnp.float32)      # kills dx=+1 row wrap

    # ---- conv1 (1x1) + bn1 + relu, batched over the bt images ----
    x2 = x_ref[...].reshape(bt * M, Cin)
    y1 = jnp.dot(x2, w1_ref[...], preferred_element_type=jnp.float32)
    y1 = jnp.maximum(y1 + b1_ref[...], 0.0)            # (bt*M, P) f32

    # ---- conv2 (3x3, stride 1, pad 1) + bn2 + relu, one image at a time ----
    zrow = jnp.zeros((1, P), jnp.float32)
    y2_parts = []
    for b in range(bt):
        y1b = y1[b * M:(b + 1) * M]                    # (M, P) f32, aligned slice

        # Pre-shift the +-1 horizontal taps in registers (explicit zero fill at
        # the image edge), so all three dx variants share the same row base in
        # the scratch:   left[j]  = (y1 * m_not_last)[j-1]   (tap dx = -1)
        #                right[j] = (y1 * m_not_first)[j+1]  (tap dx = +1)
        left = jnp.concatenate([zrow, (y1b * m_not_last)[:M - 1]], axis=0)
        right = jnp.concatenate([(y1b * m_not_first)[1:], zrow], axis=0)

        combined = jnp.concatenate(
            [left.astype(cdtype), y1b.astype(cdtype), right.astype(cdtype)],
            axis=1)                                     # (M, 3P)
        ypad_ref[pl.ds(pad, M), :] = combined           # single aligned store

        # 3 grouped dots (K = 3P) instead of 9 dots (K = P); every slice start
        # (pad + dy*W) is a multiple of 8 rows; vertical out-of-bounds rows land
        # in the zero halo, horizontal wrap was killed by the pre-masks above.
        acc = None
        for ki, dy in enumerate((-1, 0, 1)):
            lhs = ypad_ref[pl.ds(pad + dy * W, M), :]   # (M, 3P)
            t = jnp.dot(lhs, w2_ref[ki], preferred_element_type=jnp.float32)
            acc = t if acc is None else acc + t
        y2_parts.append(jnp.maximum(acc + b2_ref[...], 0.0).astype(cdtype))

    y2 = jnp.concatenate(y2_parts, axis=0)              # (bt*M, P)

    # ---- conv3 (1x1) + bn3 + identity residual + relu (batched again) ----
    y3 = jnp.dot(y2, w3_ref[...], preferred_element_type=jnp.float32)
    # Re-read x from the still-resident VMEM block instead of keeping the conv1
    # operand live across the whole conv2 loop (shorter live ranges).
    xres = x_ref[...].reshape(bt * M, Cin).astype(jnp.float32)
    out = jnp.maximum(y3 + b3_ref[...] + xres, 0.0)
    o_ref[...] = out.reshape(bt, M, Cout).astype(o_ref.dtype)


# --------------------------------- wrappers --------------------------------- #

def _fold_bn(gamma, beta, running_mean, running_var, eps=1e-5):
    scale = gamma / jnp.sqrt(running_var + eps)
    bias = beta - running_mean * scale
    return scale, bias


def bottleneck_forward_nhwc(x_nhwc, params, *, compute_dtype=jnp.bfloat16,
                            batch_tile=2):
    """Fused Bottleneck forward on NHWC input (stride=1, downsample=None, eval BN)."""
    w1, bn1, w2, bn2, w3, bn3 = params
    N, H, W, Cin = x_nhwc.shape
    planes = w1.shape[0]
    Cout = w3.shape[0]
    assert Cin == 4 * planes and Cout == Cin, \
        "identity residual requires inplanes == planes*4 (stride=1, downsample=None)"
    M = H * W
    assert M % 8 == 0, "H*W must be a multiple of 8 for aligned slabs"
    bt = min(batch_tile, N)
    assert N % bt == 0, "batch must be divisible by batch_tile"

    # Fold eval-mode BatchNorm: scale into weight output columns, keep the bias.
    s1, c1 = _fold_bn(*bn1)
    s2, c2 = _fold_bn(*bn2)
    s3, c3 = _fold_bn(*bn3)
    w1m = (w1[:, :, 0, 0].T * s1[None, :]).astype(compute_dtype)            # (Cin, P)
    # (O, I, kh, kw) -> (kh, kw, I, O) -> (3, 3P, P); rows ordered (dx, in-ch),
    # matching the lane order of the in-kernel `combined` slab.
    w2m = (jnp.transpose(w2, (2, 3, 1, 0)).reshape(3, 3 * planes, planes)
           * s2[None, None, :]).astype(compute_dtype)                       # (3, 3P, P)
    w3m = (w3[:, :, 0, 0].T * s3[None, :]).astype(compute_dtype)            # (P, Cout)
    b1 = c1.reshape(1, planes).astype(jnp.float32)
    b2 = c2.reshape(1, planes).astype(jnp.float32)
    b3 = c3.reshape(1, Cout).astype(jnp.float32)

    # (N, H, W, C) -> (N, H*W, C): free row-major reshape, lane-dense slabs.
    x2d = x_nhwc.reshape(N, M, Cin).astype(compute_dtype)

    # Vertical halo rows for the 3x3 taps: multiple of 8 and >= W.
    pad = max(8, ((W + 7) // 8) * 8)
    S = M + 2 * pad

    kernel = functools.partial(_bottleneck_kernel, H=H, W=W, pad=pad, bt=bt)
    out = pl.pallas_call(
        kernel,
        out_shape=jax.ShapeDtypeStruct((N, M, Cout), compute_dtype),
        grid=(N // bt,),
        in_specs=[
            pl.BlockSpec((bt, M, Cin), lambda n: (n, 0, 0)),           # x slab tile
            pl.BlockSpec((Cin, planes), lambda n: (0, 0)),             # w1 * bn1.scale
            pl.BlockSpec((1, planes), lambda n: (0, 0)),               # bn1 bias
            pl.BlockSpec((3, 3 * planes, planes), lambda n: (0, 0, 0)),  # w2 * bn2.scale
            pl.BlockSpec((1, planes), lambda n: (0, 0)),               # bn2 bias
            pl.BlockSpec((planes, Cout), lambda n: (0, 0)),            # w3 * bn3.scale
            pl.BlockSpec((1, Cout), lambda n: (0, 0)),                 # bn3 bias
        ],
        out_specs=pl.BlockSpec((bt, M, Cout), lambda n: (n, 0, 0)),
        scratch_shapes=[pltpu.VMEM((S, 3 * planes), compute_dtype)],
        compiler_params=pltpu.CompilerParams(
            dimension_semantics=("parallel",),       # megacore hint (v7x)
            vmem_limit_bytes=32 * 1024 * 1024),      # raise v5e's 16 MiB default
    )(x2d, w1m, b1, w2m, b2, w3m, b3)

    return out.reshape(N, H, W, Cout)


def bottleneck_forward(x_nchw, params, **kw):
    """NCHW interface matching the PyTorch module.

    In a full network you would keep activations NHWC (and bf16) end-to-end and
    call bottleneck_forward_nhwc directly; the transposes here happen once at
    the module boundary only.
    """
    x_nhwc = jnp.transpose(x_nchw, (0, 2, 3, 1))
    y = bottleneck_forward_nhwc(x_nhwc, params, **kw)
    return jnp.transpose(y, (0, 3, 1, 2))


# ----------------------------- pure-JAX reference --------------------------- #

def _reference_bottleneck(x, params):
    """Straight transcription of the PyTorch forward (eval-mode BN), NCHW, f32."""
    w1, bn1, w2, bn2, w3, bn3 = params

    def bn(y, p):
        g, b, m, v = p
        inv = g / jnp.sqrt(v + 1e-5)
        return y * inv[None, :, None, None] + (b - m * inv)[None, :, None, None]

    dn = ('NCHW', 'OIHW', 'NCHW')
    hp = jax.lax.Precision.HIGHEST
    y = jax.lax.conv_general_dilated(x, w1, (1, 1), 'VALID',
                                     dimension_numbers=dn, precision=hp)
    y = jax.nn.relu(bn(y, bn1))
    y = jax.lax.conv_general_dilated(y, w2, (1, 1), ((1, 1), (1, 1)),
                                     dimension_numbers=dn, precision=hp)
    y = jax.nn.relu(bn(y, bn2))
    y = jax.lax.conv_general_dilated(y, w3, (1, 1), 'VALID',
                                     dimension_numbers=dn, precision=hp)
    y = bn(y, bn3) + x
    return jax.nn.relu(y)


# ------------------------------------ main ---------------------------------- #

def _bn_params(key, c):
    k1, k2, k3, k4 = jax.random.split(key, 4)
    gamma = 1.0 + 0.1 * jax.random.normal(k1, (c,), jnp.float32)
    beta = 0.1 * jax.random.normal(k2, (c,), jnp.float32)
    running_mean = 0.1 * jax.random.normal(k3, (c,), jnp.float32)
    running_var = jnp.abs(jax.random.normal(k4, (c,), jnp.float32)) + 0.5
    return gamma, beta, running_mean, running_var


if __name__ == "__main__":
    key = jax.random.PRNGKey(0)
    N, H, W = 8, 8, 8            # 8 images -> 4 grid steps with batch_tile=2
    planes = 32
    inplanes = planes * 4        # 128: lane-dense channels, identity residual

    k = jax.random.split(key, 8)
    # PyTorch conv weight shapes (OIHW), bias=False
    w1 = 0.1 * jax.random.normal(k[0], (planes, inplanes, 1, 1), jnp.float32)
    w2 = 0.1 * jax.random.normal(k[1], (planes, planes, 3, 3), jnp.float32)
    w3 = 0.1 * jax.random.normal(k[2], (planes * 4, planes, 1, 1), jnp.float32)
    bn1 = _bn_params(k[3], planes)
    bn2 = _bn_params(k[4], planes)
    bn3 = _bn_params(k[5], planes * 4)

    x = jax.random.normal(k[6], (N, inplanes, H, W), jnp.float32)   # NCHW input
    params = (w1, bn1, w2, bn2, w3, bn3)

    ref = _reference_bottleneck(x, params)

    # f32 compute path: exact-parity check against the XLA reference.
    out_f32 = bottleneck_forward(x, params, compute_dtype=jnp.float32)
    jax.block_until_ready(out_f32)
    assert out_f32.shape == (N, planes * 4, H, W)
    err32 = float(jnp.max(jnp.abs(out_f32.astype(jnp.float32) - ref)))
    assert err32 < 3e-2, f"f32 kernel/reference mismatch: max_err={err32}"

    # bf16 compute path (default / perf config): loose tolerance, the f32 path
    # above is the correctness gate; this only checks mixed-precision sanity.
    out_bf16 = bottleneck_forward(x, params)
    jax.block_until_ready(out_bf16)
    assert out_bf16.shape == (N, planes * 4, H, W)
    err16 = float(jnp.max(jnp.abs(out_bf16.astype(jnp.float32) - ref)))
    assert err16 < 3.5e-1, f"bf16 kernel/reference mismatch: max_err={err16}"

    print("KERNEL_OK")
</pallas_src>

<mosaic_0001>
module attributes {stable_mosaic.version = 11 : i64} {
  func.func @_bottleneck_kernel(%arg0: i32, %arg1: memref<2x64x128xf32, #tpu.memory_space<vmem>>, %arg2: memref<128x32xf32, #tpu.memory_space<vmem>>, %arg3: memref<1x32xf32, #tpu.memory_space<vmem>>, %arg4: memref<3x96x32xf32, #tpu.memory_space<vmem>>, %arg5: memref<1x32xf32, #tpu.memory_space<vmem>>, %arg6: memref<32x128xf32, #tpu.memory_space<vmem>>, %arg7: memref<1x128xf32, #tpu.memory_space<vmem>>, %arg8: memref<2x64x128xf32, #tpu.memory_space<vmem>>, %arg9: memref<80x96xf32, #tpu.memory_space<vmem>>) attributes {dimension_semantics = [#tpu.dimension_semantics<parallel>], iteration_bounds = array<i64: 4>, scalar_prefetch = 0 : i64, scratch_operands = 1 : i64, tpu.core_type = #tpu.core_type<tc>, window_params = [{transform_indices = @transform_0, window_bounds = array<i64: 2, 64, 128>}, {pipeline_mode = #tpu.pipeline_mode<synchronous>, transform_indices = @transform_1, window_bounds = array<i64: 128, 32>}, {pipeline_mode = #tpu.pipeline_mode<synchronous>, transform_indices = @transform_2, window_bounds = array<i64: 1, 32>}, {pipeline_mode = #tpu.pipeline_mode<synchronous>, transform_indices = @transform_3, window_bounds = array<i64: 3, 96, 32>}, {pipeline_mode = #tpu.pipeline_mode<synchronous>, transform_indices = @transform_4, window_bounds = array<i64: 1, 32>}, {pipeline_mode = #tpu.pipeline_mode<synchronous>, transform_indices = @transform_5, window_bounds = array<i64: 32, 128>}, {pipeline_mode = #tpu.pipeline_mode<synchronous>, transform_indices = @transform_6, window_bounds = array<i64: 1, 128>}, {transform_indices = @transform_7, window_bounds = array<i64: 2, 64, 128>}]} {
    %cst = arith.constant 0.000000e+00 : f32
    %0 = vector.broadcast %cst : f32 to vector<8x96xf32>
    %c0 = arith.constant 0 : index
    %c0_0 = arith.constant 0 : index
    %1 = vector.load %arg9[%c0, %c0_0] : memref<80x96xf32, #tpu.memory_space<vmem>>, vector<8x96xf32>
    tpu.vector_store %arg9[%c0, %c0_0], %0 {strides = array<i32>} : memref<80x96xf32, #tpu.memory_space<vmem>>, vector<8x96xf32>,
    %cst_1 = arith.constant 0.000000e+00 : f32
    %2 = vector.broadcast %cst_1 : f32 to vector<8x96xf32>
    %c72 = arith.constant 72 : index
    %c0_2 = arith.constant 0 : index
    %3 = vector.load %arg9[%c72, %c0_2] : memref<80x96xf32, #tpu.memory_space<vmem>>, vector<8x96xf32>
    tpu.vector_store %arg9[%c72, %c0_2], %2 {strides = array<i32>} : memref<80x96xf32, #tpu.memory_space<vmem>>, vector<8x96xf32>,
    %4 = tpu.iota {dimensions = array<i32: 0>} : vector<64x32xi32>
    %c8_i32 = arith.constant 8 : i32
    %c0_i32 = arith.constant 0 : i32
    %5 = arith.cmpi eq, %c8_i32, %c0_i32 : i32
    %c1_i32 = arith.constant 1 : i32
    %6 = arith.select %5, %c1_i32, %c8_i32 : i32
    %7 = vector.broadcast %6 : i32 to vector<64x32xi32>
    %8 = arith.remsi %4, %7 : vector<64x32xi32>
    %c0_i32_3 = arith.constant 0 : i32
    %9 = vector.broadcast %c0_i32_3 : i32 to vector<64x32xi32>
    %10 = arith.cmpi ne, %8, %9 : vector<64x32xi32>
    %c0_i32_4 = arith.constant 0 : i32
    %11 = vector.broadcast %c0_i32_4 : i32 to vector<64x32xi32>
    %12 = arith.cmpi slt, %8, %11 : vector<64x32xi32>
    %c0_i32_5 = arith.constant 0 : i32
    %13 = arith.cmpi slt, %6, %c0_i32_5 : i32
    %14 = vector.broadcast %13 : i1 to vector<64x32xi1>
    %15 = vector.broadcast %14 : vector<64x32xi1> to vector<64x32xi1>
    %16 = arith.xori %12, %15 : vector<64x32xi1>
    %17 = arith.andi %16, %10 : vector<64x32xi1>
    %18 = vector.broadcast %6 : i32 to vector<64x32xi32>
    %19 = arith.addi %8, %18 : vector<64x32xi32>
    %20 = arith.select %17, %19, %8 : vector<64x32xi1>, vector<64x32xi32>
    %c7_i32 = arith.constant 7 : i32
    %21 = vector.broadcast %c7_i32 : i32 to vector<64x32xi32>
    %22 = arith.cmpi ne, %20, %21 : vector<64x32xi32>
    %23 = arith.extui %22 : vector<64x32xi1> to vector<64x32xi32>
    %24 = arith.sitofp %23 : vector<64x32xi32> to vector<64x32xf32>
    %c0_i32_6 = arith.constant 0 : i32
    %25 = vector.broadcast %c0_i32_6 : i32 to vector<64x32xi32>
    %26 = arith.cmpi ne, %20, %25 : vector<64x32xi32>
    %27 = arith.extui %26 : vector<64x32xi1> to vector<64x32xi32>
    %28 = arith.sitofp %27 : vector<64x32xi32> to vector<64x32xf32>
    %c0_7 = arith.constant 0 : index
    %c0_8 = arith.constant 0 : index
    %c0_9 = arith.constant 0 : index
    %29 = vector.load %arg1[%c0_7, %c0_8, %c0_9] : memref<2x64x128xf32, #tpu.memory_space<vmem>>, vector<2x64x128xf32>
    %30 = vector.shape_cast %29 : vector<2x64x128xf32> to vector<128x128xf32>
    %c0_10 = arith.constant 0 : index
    %c0_11 = arith.constant 0 : index
    %31 = vector.load %arg2[%c0_10, %c0_11] : memref<128x32xf32, #tpu.memory_space<vmem>>, vector<128x32xf32>
    %cst_12 = arith.constant dense<0.000000e+00> : vector<128x32xf32>
    %32 = tpu.matmul %30, %31, %cst_12 {dimension_numbers = #tpu.dot_dimension_numbers<[1], [0], [0], [1], [0, 0, 1, 1], [], []>} : vector<128x128xf32>, vector<128x32xf32>, vector<128x32xf32> -> vector<128x32xf32>
    %c0_13 = arith.constant 0 : index
    %c0_14 = arith.constant 0 : index
    %33 = vector.load %arg3[%c0_13, %c0_14] : memref<1x32xf32, #tpu.memory_space<vmem>>, vector<1x32xf32>
    %34 = vector.broadcast %33 : vector<1x32xf32> to vector<128x32xf32>
    %35 = arith.addf %32, %34 : vector<128x32xf32>
    %cst_15 = arith.constant 0.000000e+00 : f32
    %36 = vector.broadcast %cst_15 : f32 to vector<128x32xf32>
    %37 = arith.maximumf %35, %36 : vector<128x32xf32>
    %cst_16 = arith.constant 0.000000e+00 : f32
    %38 = vector.broadcast %cst_16 : f32 to vector<1x32xf32>
    %39 = vector.extract_strided_slice %37 {offsets = [0, 0], sizes = [64, 32], strides = [1, 1]} : vector<128x32xf32> to vector<64x32xf32>
    %40 = arith.mulf %39, %24 : vector<64x32xf32>
    %41 = vector.extract_strided_slice %40 {offsets = [0, 0], sizes = [63, 32], strides = [1, 1]} : vector<64x32xf32> to vector<63x32xf32>
    %42 = tpu.concatenate %38, %41 in 0 : vector<1x32xf32>, vector<63x32xf32> -> vector<64x32xf32>
    %43 = arith.mulf %39, %28 : vector<64x32xf32>
    %44 = vector.extract_strided_slice %43 {offsets = [1, 0], sizes = [63, 32], strides = [1, 1]} : vector<64x32xf32> to vector<63x32xf32>
    %45 = tpu.concatenate %44, %38 in 0 : vector<63x32xf32>, vector<1x32xf32> -> vector<64x32xf32>
    %46 = tpu.concatenate %42, %39, %45 in 1 : vector<64x32xf32>, vector<64x32xf32>, vector<64x32xf32> -> vector<64x96xf32>
    %c8 = arith.constant 8 : index
    %c0_17 = arith.constant 0 : index
    %47 = vector.load %arg9[%c8, %c0_17] : memref<80x96xf32, #tpu.memory_space<vmem>>, vector<64x96xf32>
    tpu.vector_store %arg9[%c8, %c0_17], %46 {strides = array<i32>} : memref<80x96xf32, #tpu.memory_space<vmem>>, vector<64x96xf32>,
    %c0_18 = arith.constant 0 : index
    %c0_19 = arith.constant 0 : index
    %48 = vector.load %arg9[%c0_18, %c0_19] : memref<80x96xf32, #tpu.memory_space<vmem>>, vector<64x96xf32>
    %c0_20 = arith.constant 0 : index
    %c0_21 = arith.constant 0 : index
    %c0_22 = arith.constant 0 : index
    %49 = vector.load %arg4[%c0_20, %c0_21, %c0_22] : memref<3x96x32xf32, #tpu.memory_space<vmem>>, vector<1x96x32xf32>
    %50 = vector.shape_cast %49 : vector<1x96x32xf32> to vector<96x32xf32>
    %cst_23 = arith.constant dense<0.000000e+00> : vector<64x32xf32>
    %51 = tpu.matmul %48, %50, %cst_23 {dimension_numbers = #tpu.dot_dimension_numbers<[1], [0], [0], [1], [0, 0, 1, 1], [], []>} : vector<64x96xf32>, vector<96x32xf32>, vector<64x32xf32> -> vector<64x32xf32>
    %c8_24 = arith.constant 8 : index
    %c0_25 = arith.constant 0 : index
    %52 = vector.load %arg9[%c8_24, %c0_25] : memref<80x96xf32, #tpu.memory_space<vmem>>, vector<64x96xf32>
    %c1 = arith.constant 1 : index
    %c0_26 = arith.constant 0 : index
    %c0_27 = arith.constant 0 : index
    %53 = vector.load %arg4[%c1, %c0_26, %c0_27] : memref<3x96x32xf32, #tpu.memory_space<vmem>>, vector<1x96x32xf32>
    %54 = vector.shape_cast %53 : vector<1x96x32xf32> to vector<96x32xf32>
    %cst_28 = arith.constant dense<0.000000e+00> : vector<64x32xf32>
    %55 = tpu.matmul %52, %54, %cst_28 {dimension_numbers = #tpu.dot_dimension_numbers<[1], [0], [0], [1], [0, 0, 1, 1], [], []>} : vector<64x96xf32>, vector<96x32xf32>, vector<64x32xf32> -> vector<64x32xf32>
    %56 = arith.addf %51, %55 : vector<64x32xf32>
    %c16 = arith.constant 16 : index
    %c0_29 = arith.constant 0 : index
    %57 = vector.load %arg9[%c16, %c0_29] : memref<80x96xf32, #tpu.memory_space<vmem>>, vector<64x96xf32>
    %c2 = arith.constant 2 : index
    %c0_30 = arith.constant 0 : index
    %c0_31 = arith.constant 0 : index
    %58 = vector.load %arg4[%c2, %c0_30, %c0_31] : memref<3x96x32xf32, #tpu.memory_space<vmem>>, vector<1x96x32xf32>
    %59 = vector.shape_cast %58 : vector<1x96x32xf32> to vector<96x32xf32>
    %cst_32 = arith.constant dense<0.000000e+00> : vector<64x32xf32>
    %60 = tpu.matmul %57, %59, %cst_32 {dimension_numbers = #tpu.dot_dimension_numbers<[1], [0], [0], [1], [0, 0, 1, 1], [], []>} : vector<64x96xf32>, vector<96x32xf32>, vector<64x32xf32> -> vector<64x32xf32>
    %61 = arith.addf %56, %60 : vector<64x32xf32>
    %c0_33 = arith.constant 0 : index
    %c0_34 = arith.constant 0 : index
    %62 = vector.load %arg5[%c0_33, %c0_34] : memref<1x32xf32, #tpu.memory_space<vmem>>, vector<1x32xf32>
    %63 = vector.broadcast %62 : vector<1x32xf32> to vector<64x32xf32>
    %64 = arith.addf %61, %63 : vector<64x32xf32>
    %cst_35 = arith.constant 0.000000e+00 : f32
    %65 = vector.broadcast %cst_35 : f32 to vector<64x32xf32>
    %66 = arith.maximumf %64, %65 : vector<64x32xf32>
    %67 = vector.extract_strided_slice %37 {offsets = [64, 0], sizes = [64, 32], strides = [1, 1]} : vector<128x32xf32> to vector<64x32xf32>
    %68 = arith.mulf %67, %24 : vector<64x32xf32>
    %69 = vector.extract_strided_slice %68 {offsets = [0, 0], sizes = [63, 32], strides = [1, 1]} : vector<64x32xf32> to vector<63x32xf32>
    %70 = tpu.concatenate %38, %69 in 0 : vector<1x32xf32>, vector<63x32xf32> -> vector<64x32xf32>
    %71 = arith.mulf %67, %28 : vector<64x32xf32>
    %72 = vector.extract_strided_slice %71 {offsets = [1, 0], sizes = [63, 32], strides = [1, 1]} : vector<64x32xf32> to vector<63x32xf32>
    %73 = tpu.concatenate %72, %38 in 0 : vector<63x32xf32>, vector<1x32xf32> -> vector<64x32xf32>
    %74 = tpu.concatenate %70, %67, %73 in 1 : vector<64x32xf32>, vector<64x32xf32>, vector<64x32xf32> -> vector<64x96xf32>
    %c8_36 = arith.constant 8 : index
    %c0_37 = arith.constant 0 : index
    %75 = vector.load %arg9[%c8_36, %c0_37] : memref<80x96xf32, #tpu.memory_space<vmem>>, vector<64x96xf32>
    tpu.vector_store %arg9[%c8_36, %c0_37], %74 {strides = array<i32>} : memref<80x96xf32, #tpu.memory_space<vmem>>, vector<64x96xf32>,
    %c0_38 = arith.constant 0 : index
    %c0_39 = arith.constant 0 : index
    %76 = vector.load %arg9[%c0_38, %c0_39] : memref<80x96xf32, #tpu.memory_space<vmem>>, vector<64x96xf32>
    %c0_40 = arith.constant 0 : index
    %c0_41 = arith.constant 0 : index
    %c0_42 = arith.constant 0 : index
    %77 = vector.load %arg4[%c0_40, %c0_41, %c0_42] : memref<3x96x32xf32, #tpu.memory_space<vmem>>, vector<1x96x32xf32>
    %78 = vector.shape_cast %77 : vector<1x96x32xf32> to vector<96x32xf32>
    %cst_43 = arith.constant dense<0.000000e+00> : vector<64x32xf32>
    %79 = tpu.matmul %76, %78, %cst_43 {dimension_numbers = #tpu.dot_dimension_numbers<[1], [0], [0], [1], [0, 0, 1, 1], [], []>} : vector<64x96xf32>, vector<96x32xf32>, vector<64x32xf32> -> vector<64x32xf32>
    %c8_44 = arith.constant 8 : index
    %c0_45 = arith.constant 0 : index
    %80 = vector.load %arg9[%c8_44, %c0_45] : memref<80x96xf32, #tpu.memory_space<vmem>>, vector<64x96xf32>
    %c1_46 = arith.constant 1 : index
    %c0_47 = arith.constant 0 : index
    %c0_48 = arith.constant 0 : index
    %81 = vector.load %arg4[%c1_46, %c0_47, %c0_48] : memref<3x96x32xf32, #tpu.memory_space<vmem>>, vector<1x96x32xf32>
    %82 = vector.shape_cast %81 : vector<1x96x32xf32> to vector<96x32xf32>
    %cst_49 = arith.constant dense<0.000000e+00> : vector<64x32xf32>
    %83 = tpu.matmul %80, %82, %cst_49 {dimension_numbers = #tpu.dot_dimension_numbers<[1], [0], [0], [1], [0, 0, 1, 1], [], []>} : vector<64x96xf32>, vector<96x32xf32>, vector<64x32xf32> -> vector<64x32xf32>
    %84 = arith.addf %79, %83 : vector<64x32xf32>
    %c16_50 = arith.constant 16 : index
    %c0_51 = arith.constant 0 : index
    %85 = vector.load %arg9[%c16_50, %c0_51] : memref<80x96xf32, #tpu.memory_space<vmem>>, vector<64x96xf32>
    %c2_52 = arith.constant 2 : index
    %c0_53 = arith.constant 0 : index
    %c0_54 = arith.constant 0 : index
    %86 = vector.load %arg4[%c2_52, %c0_53, %c0_54] : memref<3x96x32xf32, #tpu.memory_space<vmem>>, vector<1x96x32xf32>
    %87 = vector.shape_cast %86 : vector<1x96x32xf32> to vector<96x32xf32>
    %cst_55 = arith.constant dense<0.000000e+00> : vector<64x32xf32>
    %88 = tpu.matmul %85, %87, %cst_55 {dimension_numbers = #tpu.dot_dimension_numbers<[1], [0], [0], [1], [0, 0, 1, 1], [], []>} : vector<64x96xf32>, vector<96x32xf32>, vector<64x32xf32> -> vector<64x32xf32>
    %89 = arith.addf %84, %88 : vector<64x32xf32>
    %c0_56 = arith.constant 0 : index
    %c0_57 = arith.constant 0 : index
    %90 = vector.load %arg5[%c0_56, %c0_57] : memref<1x32xf32, #tpu.memory_space<vmem>>, vector<1x32xf32>
    %91 = vector.broadcast %90 : vector<1x32xf32> to vector<64x32xf32>
    %92 = arith.addf %89, %91 : vector<64x32xf32>
    %cst_58 = arith.constant 0.000000e+00 : f32
    %93 = vector.broadcast %cst_58 : f32 to vector<64x32xf32>
    %94 = arith.maximumf %92, %93 : vector<64x32xf32>
    %95 = tpu.concatenate %66, %94 in 0 : vector<64x32xf32>, vector<64x32xf32> -> vector<128x32xf32>
    %c0_59 = arith.constant 0 : index
    %c0_60 = arith.constant 0 : index
    %96 = vector.load %arg6[%c0_59, %c0_60] : memref<32x128xf32, #tpu.memory_space<vmem>>, vector<32x128xf32>
    %cst_61 = arith.constant dense<0.000000e+00> : vector<128x128xf32>
    %97 = tpu.matmul %95, %96, %cst_61 {dimension_numbers = #tpu.dot_dimension_numbers<[1], [0], [0], [1], [0, 0, 1, 1], [], []>} : vector<128x32xf32>, vector<32x128xf32>, vector<128x128xf32> -> vector<128x128xf32>
    %c0_62 = arith.constant 0 : index
    %c0_63 = arith.constant 0 : index
    %c0_64 = arith.constant 0 : index
    %98 = vector.load %arg1[%c0_62, %c0_63, %c0_64] : memref<2x64x128xf32, #tpu.memory_space<vmem>>, vector<2x64x128xf32>
    %99 = vector.shape_cast %98 : vector<2x64x128xf32> to vector<128x128xf32>
    %c0_65 = arith.constant 0 : index
    %c0_66 = arith.constant 0 : index
    %100 = vector.load %arg7[%c0_65, %c0_66] : memref<1x128xf32, #tpu.memory_space<vmem>>, vector<1x128xf32>
    %101 = vector.broadcast %100 : vector<1x128xf32> to vector<128x128xf32>
    %102 = arith.addf %97, %101 : vector<128x128xf32>
    %103 = arith.addf %102, %99 : vector<128x128xf32>
    %cst_67 = arith.constant 0.000000e+00 : f32
    %104 = vector.broadcast %cst_67 : f32 to vector<128x128xf32>
    %105 = arith.maximumf %103, %104 : vector<128x128xf32>
    %106 = vector.shape_cast %105 : vector<128x128xf32> to vector<2x64x128xf32>
    %c0_68 = arith.constant 0 : index
    %c0_69 = arith.constant 0 : index
    %c0_70 = arith.constant 0 : index
    %107 = vector.load %arg8[%c0_68, %c0_69, %c0_70] : memref<2x64x128xf32, #tpu.memory_space<vmem>>, vector<2x64x128xf32>
    tpu.vector_store %arg8[%c0_68, %c0_69, %c0_70], %106 {strides = array<i32>} : memref<2x64x128xf32, #tpu.memory_space<vmem>>, vector<2x64x128xf32>,
    return
  }
  func.func @transform_0(%arg0: i32) -> (i32, i32, i32) {
    %c0_i32 = arith.constant 0 : i32
    %c0_i32_0 = arith.constant 0 : i32
    %c0_i32_1 = arith.constant 0 : i32
    return %arg0, %c0_i32, %c0_i32_0 : i32, i32, i32
  }
  func.func @transform_1(%arg0: i32) -> (i32, i32) {
    %c0_i32 = arith.constant 0 : i32
    %c0_i32_0 = arith.constant 0 : i32
    %c0_i32_1 = arith.constant 0 : i32
    return %c0_i32, %c0_i32_0 : i32, i32
  }
  func.func @transform_2(%arg0: i32) -> (i32, i32) {
    %c0_i32 = arith.constant 0 : i32
    %c0_i32_0 = arith.constant 0 : i32
    %c0_i32_1 = arith.constant 0 : i32
    return %c0_i32, %c0_i32_0 : i32, i32
  }
  func.func @transform_3(%arg0: i32) -> (i32, i32, i32) {
    %c0_i32 = arith.constant 0 : i32
    %c0_i32_0 = arith.constant 0 : i32
    %c0_i32_1 = arith.constant 0 : i32
    %c0_i32_2 = arith.constant 0 : i32
    return %c0_i32, %c0_i32_0, %c0_i32_1 : i32, i32, i32
  }
  func.func @transform_4(%arg0: i32) -> (i32, i32) {
    %c0_i32 = arith.constant 0 : i32
    %c0_i32_0 = arith.constant 0 : i32
    %c0_i32_1 = arith.constant 0 : i32
    return %c0_i32, %c0_i32_0 : i32, i32
  }
  func.func @transform_5(%arg0: i32) -> (i32, i32) {
    %c0_i32 = arith.constant 0 : i32
    %c0_i32_0 = arith.constant 0 : i32
    %c0_i32_1 = arith.constant 0 : i32
    return %c0_i32, %c0_i32_0 : i32, i32
  }
  func.func @transform_6(%arg0: i32) -> (i32, i32) {
    %c0_i32 = arith.constant 0 : i32
    %c0_i32_0 = arith.constant 0 : i32
    %c0_i32_1 = arith.constant 0 : i32
    return %c0_i32, %c0_i32_0 : i32, i32
  }
  func.func @transform_7(%arg0: i32) -> (i32, i32, i32) {
    %c0_i32 = arith.constant 0 : i32
    %c0_i32_0 = arith.constant 0 : i32
    %c0_i32_1 = arith.constant 0 : i32
    return %arg0, %c0_i32, %c0_i32_0 : i32, i32, i32
  }
}

</mosaic_0001>

<llo_original>
// kernel: tpu_custom_call.1
$region0: #{tpu_custom_call.1}
  #allocation0 [shape = 'u32[]', space=smem, size = 0x4, offset = 0x4, fixed_abs, tag = 'smem constant byte address 0x4 - core index']
  #allocation1 [shape = 'u32[72,128]{1,0:T(1,128)}', space=vmem, size = 0x9000, scoped, tag = 'internal scratch']
  #allocation2 [shape = 'f32[80,96]{1,0:T(8,128)}', space=vmem, size = 0xa000, scoped, tag = 'scratch operand']
  %s0 = inlined_call_operand.hbm [shape: f32[8,64,128], index: 0, kind: input, shape index: {}]
  %s1 = inlined_call_operand.vmem [shape: f32[128,32], index: 1, kind: input, shape index: {}]
  %s2 = inlined_call_operand.vmem [shape: f32[1,32], index: 2, kind: input, shape index: {}]
  %s3 = inlined_call_operand.vmem [shape: f32[3,96,32], index: 3, kind: input, shape index: {}]
  %s4 = inlined_call_operand.vmem [shape: f32[1,32], index: 4, kind: input, shape index: {}]
  %s5 = inlined_call_operand.vmem [shape: f32[32,128], index: 5, kind: input, shape index: {}]
  %s6 = inlined_call_operand.vmem [shape: f32[1,128], index: 6, kind: input, shape index: {}]
  %s7 = inlined_call_operand.hbm [shape: f32[8,64,128], index: 7, kind: output, shape index: {}]
  %s8 = sld [smem:[#allocation0]]
  $region65: #{tpu_custom_call.1} parent=0
    _
  %s10 = ssub.s32 1, %s8
  %s11 = scalar_select 0, %s10, %s8
  $region1: #{tpu_custom_call.1} parent=0
    #allocation3 [shape = 'u8[131072]{0}', space=vmem, size = 0x20000, scoped, tag = 'input window, operand 0']
    #allocation4 [shape = 's32[2]{0}', space=sflag, size = 0x8, scoped, tag = 'scoped memory for tpu_custom_call.1']
    #allocation5 [shape = 's32[2]{0}', space=sflag, size = 0x8, scoped, tag = 'scoped memory for tpu_custom_call.1']
    #allocation6 [shape = 'u8[131072]{0}', space=vmem, size = 0x20000, scoped, tag = 'output window, operand 0']
    %12 = vsyncpa [#allocation4], 0
    %s13 = scalar_lea.sflag [#allocation4], 1
    %14 = vsyncpa %s13, 0
    %15 = vsyncpa [#allocation5], 0
    %s16 = scalar_lea.sflag [#allocation5], 1
    %17 = vsyncpa %s16, 0
    loop: start=0, step=1, limit=6
    $region2: #{tpu_custom_call.1} parent=1 // loop_pre_header
      _
    $region3: #{tpu_custom_call.1} parent=1 // loop_header
      %s19 = sphi 0, %s23
      %p20 = scmp.ge.s32.totalorder %s19, 6
      %s29 = sphi 0, %s31
      %s32 = sphi 0, %s29
      %s33 = sphi 0, %s32
      %s49 = sphi 0, %s33
      %s53 = sphi 0, %s53
      %s55 = sphi 0, %s53
      %s56 = sphi 0, %s55
      %s70 = sphi 0, %s56
      %s74 = sphi 0, %s74
      %s76 = sphi 0, %s74
      %s77 = sphi 0, %s76
      %s91 = sphi 0, %s77
      %s95 = sphi 0, %s95
      %s97 = sphi 0, %s95
      %s98 = sphi 0, %s97
      %s112 = sphi 0, %s98
      %s116 = sphi 0, %s116
      %s118 = sphi 0, %s116
      %s119 = sphi 0, %s118
      %s133 = sphi 0, %s119
      %s137 = sphi 0, %s137
      %s139 = sphi 0, %s137
      %s140 = sphi 0, %s139
      %s154 = sphi 0, %s140
      %s158 = sphi 0, %s158
      %s160 = sphi 0, %s158
      %s161 = sphi 0, %s160
      %s175 = sphi 0, %s161
      %s181 = sphi 0, %s183
      %s184 = sphi 0, %s181
      %s185 = sphi 0, %s184
      %s201 = sphi 0, %s185
    $region4: #{tpu_custom_call.1} parent=1 // loop_header_branch
      %22 = sbr.rel (%p20) target = $region8
    $region5: #{tpu_custom_call.1} parent=1 // loop_body
      %s24 = ssub.s32 %s19, 1
      %s25 = ssub.s32 %s19, 2
      %s26 = sadd.s32 %s19, 1
      %s27 = ssub.s32 %s19, %s26
      %p28 = scmp.eq.s32.totalorder %s27, 0
      %s30 = sadd.s32 %s29, 1
      %s31 = scalar_select %p28, %s29, %s30
      %p34 = pneg %p28
      %p35 = scmp.eq.s32.totalorder %s19, 3
      %p36 = por %p34, %p35
      %p37 = scmp.ne.s32.totalorder %s29, %s32
      %p38 = scmp.eq.s32.totalorder %s19, 0
      %p39 = por %p37, %p38
      %p40 = scmp.ne.s32.totalorder %s29, %s32
      %p41 = scmp.eq.s32.totalorder %s24, 3
      %p42 = por %p40, %p41
      %p43 = scmp.ne.s32.totalorder %s32, %s33
      %p44 = scmp.eq.s32.totalorder %s24, 0
      %p45 = por %p43, %p44
      %p46 = scmp.ne.s32.totalorder %s32, %s33
      %p47 = scmp.eq.s32.totalorder %s25, 3
      %p48 = por %p46, %p47
      %p50 = scmp.ne.s32.totalorder %s33, %s49
      %p51 = scmp.eq.s32.totalorder %s25, 0
      %p52 = por %p50, %p51
      %s54 = sadd.s32 %s53, 1
      %p57 = scmp.eq.s32.totalorder %s19, 3
      %p58 = scmp.ne.s32.totalorder %s53, %s55
      %p59 = scmp.eq.s32.totalorder %s19, 0
      %p60 = por %p58, %p59
      %p61 = scmp.ne.s32.totalorder %s53, %s55
      %p62 = scmp.eq.s32.totalorder %s24, 3
      %p63 = por %p61, %p62
      %p64 = scmp.ne.s32.totalorder %s55, %s56
      %p65 = scmp.eq.s32.totalorder %s24, 0
      %p66 = por %p64, %p65
      %p67 = scmp.ne.s32.totalorder %s55, %s56
      %p68 = scmp.eq.s32.totalorder %s25, 3
      %p69 = por %p67, %p68
      %p71 = scmp.ne.s32.totalorder %s56, %s70
      %p72 = scmp.eq.s32.totalorder %s25, 0
      %p73 = por %p71, %p72
      %s75 = sadd.s32 %s74, 1
      %p78 = scmp.eq.s32.totalorder %s19, 3
      %p79 = scmp.ne.s32.totalorder %s74, %s76
      %p80 = scmp.eq.s32.totalorder %s19, 0
      %p81 = por %p79, %p80
      %p82 = scmp.ne.s32.totalorder %s74, %s76
      %p83 = scmp.eq.s32.totalorder %s24, 3
      %p84 = por %p82, %p83
      %p85 = scmp.ne.s32.totalorder %s76, %s77
      %p86 = scmp.eq.s32.totalorder %s24, 0
      %p87 = por %p85, %p86
      %p88 = scmp.ne.s32.totalorder %s76, %s77
      %p89 = scmp.eq.s32.totalorder %s25, 3
      %p90 = por %p88, %p89
      %p92 = scmp.ne.s32.totalorder %s77, %s91
      %p93 = scmp.eq.s32.totalorder %s25, 0
      %p94 = por %p92, %p93
      %s96 = sadd.s32 %s95, 1
      %p99 = scmp.eq.s32.totalorder %s19, 3
      %p100 = scmp.ne.s32.totalorder %s95, %s97
      %p101 = scmp.eq.s32.totalorder %s19, 0
      %p102 = por %p100, %p101
      %p103 = scmp.ne.s32.totalorder %s95, %s97
      %p104 = scmp.eq.s32.totalorder %s24, 3
      %p105 = por %p103, %p104
      %p106 = scmp.ne.s32.totalorder %s97, %s98
      %p107 = scmp.eq.s32.totalorder %s24, 0
      %p108 = por %p106, %p107
      %p109 = scmp.ne.s32.totalorder %s97, %s98
      %p110 = scmp.eq.s32.totalorder %s25, 3
      %p111 = por %p109, %p110
      %p113 = scmp.ne.s32.totalorder %s98, %s112
      %p114 = scmp.eq.s32.totalorder %s25, 0
      %p115 = por %p113, %p114
      %s117 = sadd.s32 %s116, 1
      %p120 = scmp.eq.s32.totalorder %s19, 3
      %p121 = scmp.ne.s32.totalorder %s116, %s118
      %p122 = scmp.eq.s32.totalorder %s19, 0
      %p123 = por %p121, %p122
      %p124 = scmp.ne.s32.totalorder %s116, %s118
      %p125 = scmp.eq.s32.totalorder %s24, 3
      %p126 = por %p124, %p125
      %p127 = scmp.ne.s32.totalorder %s118, %s119
      %p128 = scmp.eq.s32.totalorder %s24, 0
      %p129 = por %p127, %p128
      %p130 = scmp.ne.s32.totalorder %s118, %s119
      %p131 = scmp.eq.s32.totalorder %s25, 3
      %p132 = por %p130, %p131
      %p134 = scmp.ne.s32.totalorder %s119, %s133
      %p135 = scmp.eq.s32.totalorder %s25, 0
      %p136 = por %p134, %p135
      %s138 = sadd.s32 %s137, 1
      %p141 = scmp.eq.s32.totalorder %s19, 3
      %p142 = scmp.ne.s32.totalorder %s137, %s139
      %p143 = scmp.eq.s32.totalorder %s19, 0
      %p144 = por %p142, %p143
      %p145 = scmp.ne.s32.totalorder %s137, %s139
      %p146 = scmp.eq.s32.totalorder %s24, 3
      %p147 = por %p145, %p146
      %p148 = scmp.ne.s32.totalorder %s139, %s140
      %p149 = scmp.eq.s32.totalorder %s24, 0
      %p150 = por %p148, %p149
      %p151 = scmp.ne.s32.totalorder %s139, %s140
      %p152 = scmp.eq.s32.totalorder %s25, 3
      %p153 = por %p151, %p152
      %p155 = scmp.ne.s32.totalorder %s140, %s154
      %p156 = scmp.eq.s32.totalorder %s25, 0
      %p157 = por %p155, %p156
      %s159 = sadd.s32 %s158, 1
      %p162 = scmp.eq.s32.totalorder %s19, 3
      %p163 = scmp.ne.s32.totalorder %s158, %s160
      %p164 = scmp.eq.s32.totalorder %s19, 0
      %p165 = por %p163, %p164
      %p166 = scmp.ne.s32.totalorder %s158, %s160
      %p167 = scmp.eq.s32.totalorder %s24, 3
      %p168 = por %p166, %p167
      %p169 = scmp.ne.s32.totalorder %s160, %s161
      %p170 = scmp.eq.s32.totalorder %s24, 0
      %p171 = por %p169, %p170
      %p172 = scmp.ne.s32.totalorder %s160, %s161
      %p173 = scmp.eq.s32.totalorder %s25, 3
      %p174 = por %p172, %p173
      %p176 = scmp.ne.s32.totalorder %s161, %s175
      %p177 = scmp.eq.s32.totalorder %s25, 0
      %p178 = por %p176, %p177
      %s179 = ssub.s32 %s19, %s26
      %p180 = scmp.eq.s32.totalorder %s179, 0
      %s182 = sadd.s32 %s181, 1
      %s183 = scalar_select %p180, %s181, %s182
      %p186 = pneg %p180
      %p187 = scmp.eq.s32.totalorder %s19, 3
      %p188 = por %p186, %p187
      %p189 = scmp.ne.s32.totalorder %s181, %s184
      %p190 = scmp.eq.s32.totalorder %s19, 0
      %p191 = por %p189, %p190
      %p192 = scmp.ne.s32.totalorder %s181, %s184
      %p193 = scmp.eq.s32.totalorder %s24, 3
      %p194 = por %p192, %p193
      %p195 = scmp.ne.s32.totalorder %s184, %s185
      %p196 = scmp.eq.s32.totalorder %s24, 0
      %p197 = por %p195, %p196
      %p198 = scmp.ne.s32.totalorder %s184, %s185
      %p199 = scmp.eq.s32.totalorder %s25, 3
      %p200 = por %p198, %p199
      %p202 = scmp.ne.s32.totalorder %s185, %s201
      %p203 = scmp.eq.s32.totalorder %s25, 0
      %p204 = por %p202, %p203
      %p205 = scmp.le.s32.totalorder 1, %s19
      %p206 = scmp.lt.s32.totalorder %s19, 5
      %p207 = pnand %p205, %p206
      %p208 = pneg %p207
      // Predicated region
      $region9: #{tpu_custom_call.1} parent=5 // pred_check
        _
      $region10: #{tpu_custom_call.1} parent=5 // pred_check_branch
        %210 = sbr.rel (%p207) target = $region12
      $region11: #{tpu_custom_call.1} parent=5 // pred_region
        %s211 = ssub.s32 %s19, 1
        // Predicated region
        $region13: #{tpu_custom_call.1} parent=11 // pred_check
          %p212 = pneg %p66
        $region14: #{tpu_custom_call.1} parent=11 // pred_check_branch
          %214 = sbr.rel (%p212) target = $region16
        $region15: #{tpu_custom_call.1} parent=11 // pred_region
          _
        $region16: #{tpu_custom_call.1} parent=11 // pred_fallthru
          _
        // Predicated region
        $region17: #{tpu_custom_call.1} parent=11 // pred_check
          %p215 = pneg %p87
        $region18: #{tpu_custom_call.1} parent=11 // pred_check_branch
          %217 = sbr.rel (%p215) target = $region20
        $region19: #{tpu_custom_call.1} parent=11 // pred_region
          _
        $region20: #{tpu_custom_call.1} parent=11 // pred_fallthru
          _
        // Predicated region
        $region21: #{tpu_custom_call.1} parent=11 // pred_check
          %p218 = pneg %p108
        $region22: #{tpu_custom_call.1} parent=11 // pred_check_branch
          %220 = sbr.rel (%p218) target = $region24
        $region23: #{tpu_custom_call.1} parent=11 // pred_region
          _
        $region24: #{tpu_custom_call.1} parent=11 // pred_fallthru
          _
        // Predicated region
        $region25: #{tpu_custom_call.1} parent=11 // pred_check
          %p221 = pneg %p129
        $region26: #{tpu_custom_call.1} parent=11 // pred_check_branch
          %223 = sbr.rel (%p221) target = $region28
        $region27: #{tpu_custom_call.1} parent=11 // pred_region
          _
        $region28: #{tpu_custom_call.1} parent=11 // pred_fallthru
          _
        // Predicated region
        $region29: #{tpu_custom_call.1} parent=11 // pred_check
          %p224 = pneg %p150
        $region30: #{tpu_custom_call.1} parent=11 // pred_check_branch
          %226 = sbr.rel (%p224) target = $region32
        $region31: #{tpu_custom_call.1} parent=11 // pred_region
          _
        $region32: #{tpu_custom_call.1} parent=11 // pred_fallthru
          _
        // Predicated region
        $region33: #{tpu_custom_call.1} parent=11 // pred_check
          %p227 = pneg %p171
        $region34: #{tpu_custom_call.1} parent=11 // pred_check_branch
          %229 = sbr.rel (%p227) target = $region36
        $region35: #{tpu_custom_call.1} parent=11 // pred_region
          _
        $region36: #{tpu_custom_call.1} parent=11 // pred_fallthru
          _
      $region12: #{tpu_custom_call.1} parent=5 // pred_fallthru
        _
      %p230 = scmp.lt.s32.totalorder %s19, 4
      // Predicated region
      $region37: #{tpu_custom_call.1} parent=5 // pred_check
        %p231 = pneg %p230
      $region38: #{tpu_custom_call.1} parent=5 // pred_check_branch
        %233 = sbr.rel (%p231) target = $region40
      $region39: #{tpu_custom_call.1} parent=5 // pred_region
        // Predicated region
        $region41: #{tpu_custom_call.1} parent=39 // pred_check
          %p234 = pneg %p39
        $region42: #{tpu_custom_call.1} parent=39 // pred_check_branch
          %236 = sbr.rel (%p234) target = $region44
        $region43: #{tpu_custom_call.1} parent=39 // pred_region
          %s237 = sand.u32 %s29, 1
          %s238 = scalar_lea.sflag [#allocation4], %s237
          %s239 = sand.u32 %s29, 1
          %s240 = smul.addr %s239, 128
          %s241 = scalar_lea.vmem [#allocation3], %s240
          %s242 = smul.u32 2, %s19
          %244 = vsyncadd %s238, 0
          %s245 = smul.addr %s242, 8
          %s246 = smul.addr %s245, 8
          %s247 = scalar_lea.hbm %s0, %s246
          %s248 = sshll.u32 %s247, 4
          %s249 = int_to_ptr.hbm [resolvable:$true] %s248
          %s250 = sshll.u32 %s241, 4
          %s251 = int_to_ptr.vmem [resolvable:$true] %s250
          %256 = dma.hbm_to_vmem [thread:$0]  %s249, 2048, %s251, %s238, 128, 128, 8
        $region44: #{tpu_custom_call.1} parent=39 // pred_fallthru
          _
      $region40: #{tpu_custom_call.1} parent=5 // pred_fallthru
        _
      %p257 = scmp.le.s32.totalorder 1, %s19
      %p258 = scmp.lt.s32.totalorder %s19, 5
      %p259 = pnand %p257, %p258
      %p260 = pneg %p259
      // Predicated region
      $region45: #{tpu_custom_call.1} parent=5 // pred_check
        _
      $region46: #{tpu_custom_call.1} parent=5 // pred_check_branch
        %262 = sbr.rel (%p259) target = $region48
      $region47: #{tpu_custom_call.1} parent=5 // pred_region
        %s263 = ssub.s32 %s19, 1
        %s264 = sand.u32 %s32, 1
        %s265 = scalar_lea.sflag [#allocation4], %s264
        %s266 = sand.u32 %s32, 1
        %s267 = smul.addr %s266, 128
        %s268 = scalar_lea.vmem [#allocation3], %s267
        // Predicated region
        $region49: #{tpu_custom_call.1} parent=47 // pred_check
          %p269 = pneg %p45
        $region50: #{tpu_custom_call.1} parent=47 // pred_check_branch
          %271 = sbr.rel (%p269) target = $region52
        $region51: #{tpu_custom_call.1} parent=47 // pred_region
          %273 = dma.done %s265, 2048
        $region52: #{tpu_custom_call.1} parent=47 // pred_fallthru
          _
        %s274 = sand.u32 %s32, 1
        %s275 = scalar_lea.sflag [#allocation4], %s274
        %s276 = sand.u32 %s32, 1
        %s277 = smul.addr %s276, 128
        %s278 = scalar_lea.vmem [#allocation3], %s277
        %p279 = pneg %p45
        %p280 = pneg %p42
        %p281 = pneg %p66
        %p282 = pneg %p63
        %p283 = pneg %p87
        %p284 = pneg %p84
        %p285 = pneg %p108
        %p286 = pneg %p105
        %p287 = pneg %p129
        %p288 = pneg %p126
        %p289 = pneg %p150
        %p290 = pneg %p147
        %p291 = pneg %p171
        %p292 = pneg %p168
        %p293 = pneg %p197
        %p294 = pneg %p194
        %s295 = sand.u32 %s184, 1
        %s296 = scalar_lea.sflag [#allocation5], %s295
        %s297 = sand.u32 %s184, 1
        %s298 = smul.addr %s297, 128
        %s299 = scalar_lea.vmem [#allocation6], %s298
        %s300 = smul.u32 2, %s24
        %s301 = smul.u32 2, %s24
        %vm302 = vcmask 785408
        %303 = vst.msk [vmem:[#allocation2] sm:$0xff] %vm302, 0.0
        %304 = vst.msk [vmem:[#allocation2 + $0x48] sm:$0xff] %vm302, 0.0
        %v305 = vlaneseq
        %v306 = vshrl.u32 %v305, 7
        %v307 = vadd.s32 %v306, 8
        %v308 = vadd.s32 %v306, 16
        %v309 = vadd.s32 %v306, 24
        %v310 = vadd.s32 %v306, 32
        %v311 = vadd.s32 %v306, 40
        %v312 = vadd.s32 %v306, 48
        %v313 = vadd.s32 %v306, 56
        %vm314 = vcmp.lt.s32.totalorder %v306, 0
        %v315 = vsub.s32 0, %v306
        %v316 = vsel %vm314, %v315, %v306
        %v317 = vshrl.u32 %v316, 3
        %v318 = vand.u32 %v316, 7
        %v319 = vsub.s32 0, %v318
        %v320 = vsel %vm314, %v319, %v318
        %vm321 = vcmp.lt.s32.totalorder %v307, 0
        %v322 = vsub.s32 0, %v307
        %v323 = vsel %vm321, %v322, %v307
        %v324 = vshrl.u32 %v323, 3
        %v325 = vand.u32 %v323, 7
        %v326 = vsub.s32 0, %v325
        %v327 = vsel %vm321, %v326, %v325
        %vm328 = vcmp.lt.s32.totalorder %v308, 0
        %v329 = vsub.s32 0, %v308
        %v330 = vsel %vm328, %v329, %v308
        %v331 = vshrl.u32 %v330, 3
        %v332 = vand.u32 %v330, 7
        %v333 = vsub.s32 0, %v332
        %v334 = vsel %vm328, %v333, %v332
        %vm335 = vcmp.lt.s32.totalorder %v309, 0
        %v336 = vsub.s32 0, %v309
        %v337 = vsel %vm335, %v336, %v309
        %v338 = vshrl.u32 %v337, 3
        %v339 = vand.u32 %v337, 7
        %v340 = vsub.s32 0, %v339
        %v341 = vsel %vm335, %v340, %v339
        %vm342 = vcmp.lt.s32.totalorder %v310, 0
        %v343 = vsub.s32 0, %v310
        %v344 = vsel %vm342, %v343, %v310
        %v345 = vshrl.u32 %v344, 3
        %v346 = vand.u32 %v344, 7
        %v347 = vsub.s32 0, %v346
        %v348 = vsel %vm342, %v347, %v346
        %vm349 = vcmp.lt.s32.totalorder %v311, 0
        %v350 = vsub.s32 0, %v311
        %v351 = vsel %vm349, %v350, %v311
        %v352 = vshrl.u32 %v351, 3
        %v353 = vand.u32 %v351, 7
        %v354 = vsub.s32 0, %v353
        %v355 = vsel %vm349, %v354, %v353
        %vm356 = vcmp.lt.s32.totalorder %v312, 0
        %v357 = vsub.s32 0, %v312
        %v358 = vsel %vm356, %v357, %v312
        %v359 = vshrl.u32 %v358, 3
        %v360 = vand.u32 %v358, 7
        %v361 = vsub.s32 0, %v360
        %v362 = vsel %vm356, %v361, %v360
        %vm363 = vcmp.lt.s32.totalorder %v313, 0
        %v364 = vsub.s32 0, %v313
        %v365 = vsel %vm363, %v364, %v313
        %v366 = vshrl.u32 %v365, 3
        %v367 = vand.u32 %v365, 7
        %v368 = vsub.s32 0, %v367
        %v369 = vsel %vm363, %v368, %v367
        %vm370 = vcmp.ne.s32.totalorder %v320, 0
        %vm371 = vcmp.ne.s32.totalorder %v327, 0
        %vm372 = vcmp.ne.s32.totalorder %v334, 0
        %vm373 = vcmp.ne.s32.totalorder %v341, 0
        %vm374 = vcmp.ne.s32.totalorder %v348, 0
        %vm375 = vcmp.ne.s32.totalorder %v355, 0
        %vm376 = vcmp.ne.s32.totalorder %v362, 0
        %vm377 = vcmp.ne.s32.totalorder %v369, 0
        %vm378 = vcmp.lt.s32.totalorder %v320, 0
        %vm379 = vcmp.lt.s32.totalorder %v327, 0
        %vm380 = vcmp.lt.s32.totalorder %v334, 0
        %vm381 = vcmp.lt.s32.totalorder %v341, 0
        %vm382 = vcmp.lt.s32.totalorder %v348, 0
        %vm383 = vcmp.lt.s32.totalorder %v355, 0
        %vm384 = vcmp.lt.s32.totalorder %v362, 0
        %vm385 = vcmp.lt.s32.totalorder %v369, 0
        %vm386 = vmand %vm378, %vm370
        %vm387 = vmand %vm379, %vm371
        %vm388 = vmand %vm380, %vm372
        %vm389 = vmand %vm381, %vm373
        %vm390 = vmand %vm382, %vm374
        %vm391 = vmand %vm383, %vm375
        %vm392 = vmand %vm384, %vm376
        %vm393 = vmand %vm385, %vm377
        %v394 = vadd.s32 %v320, 8
        %v395 = vadd.s32 %v327, 8
        %v396 = vadd.s32 %v334, 8
        %v397 = vadd.s32 %v341, 8
        %v398 = vadd.s32 %v348, 8
        %v399 = vadd.s32 %v355, 8
        %v400 = vadd.s32 %v362, 8
        %v401 = vadd.s32 %v369, 8
        %v402 = vsel %vm386, %v394, %v320
        %v403 = vsel %vm387, %v395, %v327
        %v404 = vsel %vm388, %v396, %v334
        %v405 = vsel %vm389, %v397, %v341
        %v406 = vsel %vm390, %v398, %v348
        %v407 = vsel %vm391, %v399, %v355
        %v408 = vsel %vm392, %v400, %v362
        %v409 = vsel %vm393, %v401, %v369
        %vm410 = vcmp.ne.s32.totalorder %v402, 7
        %vm411 = vcmp.ne.s32.totalorder %v403, 7
        %vm412 = vcmp.ne.s32.totalorder %v404, 7
        %vm413 = vcmp.ne.s32.totalorder %v405, 7
        %vm414 = vcmp.ne.s32.totalorder %v406, 7
        %vm415 = vcmp.ne.s32.totalorder %v407, 7
        %vm416 = vcmp.ne.s32.totalorder %v408, 7
        %vm417 = vcmp.ne.s32.totalorder %v409, 7
        %v418 = vsel %vm410, 1, 0
        %v419 = vsel %vm411, 1, 0
        %v420 = vsel %vm412, 1, 0
        %v421 = vsel %vm413, 1, 0
        %v422 = vsel %vm414, 1, 0
        %v423 = vsel %vm415, 1, 0
        %v424 = vsel %vm416, 1, 0
        %v425 = vsel %vm417, 1, 0
        %v426 = vcvt.s32.f32 %v418
        %v427 = vcvt.s32.f32 %v419
        %v428 = vcvt.s32.f32 %v420
        %v429 = vcvt.s32.f32 %v421
        %v430 = vcvt.s32.f32 %v422
        %v431 = vcvt.s32.f32 %v423
        %v432 = vcvt.s32.f32 %v424
        %v433 = vcvt.s32.f32 %v425
        %vm434 = vcmp.ne.s32.totalorder %v402, 0
        %vm435 = vcmp.ne.s32.totalorder %v403, 0
        %vm436 = vcmp.ne.s32.totalorder %v404, 0
        %vm437 = vcmp.ne.s32.totalorder %v405, 0
        %vm438 = vcmp.ne.s32.totalorder %v406, 0
        %vm439 = vcmp.ne.s32.totalorder %v407, 0
        %vm440 = vcmp.ne.s32.totalorder %v408, 0
        %vm441 = vcmp.ne.s32.totalorder %v409, 0
        %v442 = vsel %vm434, 1, 0
        %v443 = vsel %vm435, 1, 0
        %v444 = vsel %vm436, 1, 0
        %v445 = vsel %vm437, 1, 0
        %v446 = vsel %vm438, 1, 0
        %v447 = vsel %vm439, 1, 0
        %v448 = vsel %vm440, 1, 0
        %v449 = vsel %vm441, 1, 0
        %v450 = vcvt.s32.f32 %v442
        %v451 = vcvt.s32.f32 %v443
        %v452 = vcvt.s32.f32 %v444
        %v453 = vcvt.s32.f32 %v445
        %v454 = vcvt.s32.f32 %v446
        %v455 = vcvt.s32.f32 %v447
        %v456 = vcvt.s32.f32 %v448
        %v457 = vcvt.s32.f32 %v449
        %v458 = vld [vmem:[%s268] sm:$0xff]
        %v459 = vld [vmem:[%s268 + $0x8] sm:$0xff]
        %v460 = vld [vmem:[%s268 + $0x10] sm:$0xff]
        %v461 = vld [vmem:[%s268 + $0x18] sm:$0xff]
        %v462 = vld [vmem:[%s268 + $0x20] sm:$0xff]
        %v463 = vld [vmem:[%s268 + $0x28] sm:$0xff]
        %v464 = vld [vmem:[%s268 + $0x30] sm:$0xff]
        %v465 = vld [vmem:[%s268 + $0x38] sm:$0xff]
        %v466 = vld [vmem:[%s268 + $0x40] sm:$0xff]
        %v467 = vld [vmem:[%s268 + $0x48] sm:$0xff]
        %v468 = vld [vmem:[%s268 + $0x50] sm:$0xff]
        %v469 = vld [vmem:[%s268 + $0x58] sm:$0xff]
        %v470 = vld [vmem:[%s268 + $0x60] sm:$0xff]
        %v471 = vld [vmem:[%s268 + $0x68] sm:$0xff]
        %v472 = vld [vmem:[%s268 + $0x70] sm:$0xff]
        %v473 = vld [vmem:[%s268 + $0x78] sm:$0xff]
        %v474 = vld [vmem:[%s1] sm:$0xff]
        %v475 = vld [vmem:[%s1 + $0x8] sm:$0xff]
        %v476 = vld [vmem:[%s1 + $0x10] sm:$0xff]
        %v477 = vld [vmem:[%s1 + $0x18] sm:$0xff]
        %v478 = vld [vmem:[%s1 + $0x20] sm:$0xff]
        %v479 = vld [vmem:[%s1 + $0x28] sm:$0xff]
        %v480 = vld [vmem:[%s1 + $0x30] sm:$0xff]
        %v481 = vld [vmem:[%s1 + $0x38] sm:$0xff]
        %v482 = vld [vmem:[%s1 + $0x40] sm:$0xff]
        %v483 = vld [vmem:[%s1 + $0x48] sm:$0xff]
        %v484 = vld [vmem:[%s1 + $0x50] sm:$0xff]
        %v485 = vld [vmem:[%s1 + $0x58] sm:$0xff]
        %v486 = vld [vmem:[%s1 + $0x60] sm:$0xff]
        %v487 = vld [vmem:[%s1 + $0x68] sm:$0xff]
        %v488 = vld [vmem:[%s1 + $0x70] sm:$0xff]
        %v489 = vld [vmem:[%s1 + $0x78] sm:$0xff]
        %v490 = vld [vmem:[%s2] sm:$0x1]
        %v492 = vperm.slane %v490, 0
        %494 = vmatpush.msra.mxu0 %v489
        %495 = vmatpush.msra.mxu0 %v488
        %496 = vmatpush.msra.mxu0 %v487
        %497 = vmatpush.msra.mxu0 %v486
        %498 = vmatpush.msra.mxu0 %v485
        %499 = vmatpush.msra.mxu0 %v484
        %500 = vmatpush.msra.mxu0 %v483
        %501 = vmatpush.msra.mxu0 %v482
        %502 = vmatpush.msra.mxu0 %v481
        %503 = vmatpush.msra.mxu0 %v480
        %504 = vmatpush.msra.mxu0 %v479
        %505 = vmatpush.msra.mxu0 %v478
        %506 = vmatpush.msra.mxu0 %v477
        %507 = vmatpush.msra.mxu0 %v476
        %508 = vmatpush.msra.mxu0 %v475
        %509 = vmatpush.msra.mxu0 %v474
        %510 = vmatmul.f32.gmra.mxu0 %v458
        %v511 = vpop.f32.mrf.mxu0
        %v512 = vadd.f32 %v492, %v511
        %513 = vmatmul.f32.gmra.mxu0 %v459
        %v514 = vpop.f32.mrf.mxu0
        %v515 = vadd.f32 %v492, %v514
        %516 = vmatmul.f32.gmra.mxu0 %v460
        %v517 = vpop.f32.mrf.mxu0
        %v518 = vadd.f32 %v492, %v517
        %519 = vmatmul.f32.gmra.mxu0 %v461
        %v520 = vpop.f32.mrf.mxu0
        %v521 = vadd.f32 %v492, %v520
        %522 = vmatmul.f32.gmra.mxu0 %v462
        %v523 = vpop.f32.mrf.mxu0
        %v524 = vadd.f32 %v492, %v523
        %525 = vmatmul.f32.gmra.mxu0 %v463
        %v526 = vpop.f32.mrf.mxu0
        %v527 = vadd.f32 %v492, %v526
        %528 = vmatmul.f32.gmra.mxu0 %v464
        %v529 = vpop.f32.mrf.mxu0
        %v530 = vadd.f32 %v492, %v529
        %531 = vmatmul.f32.gmra.mxu0 %v465
        %v532 = vpop.f32.mrf.mxu0
        %v533 = vadd.f32 %v492, %v532
        %534 = vmatmul.f32.gmra.mxu0 %v466
        %v535 = vpop.f32.mrf.mxu0
        %v536 = vadd.f32 %v492, %v535
        %537 = vmatmul.f32.gmra.mxu0 %v467
        %v538 = vpop.f32.mrf.mxu0
        %v539 = vadd.f32 %v492, %v538
        %540 = vmatmul.f32.gmra.mxu0 %v468
        %v541 = vpop.f32.mrf.mxu0
        %v542 = vadd.f32 %v492, %v541
        %543 = vmatmul.f32.gmra.mxu0 %v469
        %v544 = vpop.f32.mrf.mxu0
        %v545 = vadd.f32 %v492, %v544
        %546 = vmatmul.f32.gmra.mxu0 %v470
        %v547 = vpop.f32.mrf.mxu0
        %v548 = vadd.f32 %v492, %v547
        %549 = vmatmul.f32.gmra.mxu0 %v471
        %v550 = vpop.f32.mrf.mxu0
        %v551 = vadd.f32 %v492, %v550
        %552 = vmatmul.f32.gmra.mxu0 %v472
        %v553 = vpop.f32.mrf.mxu0
        %v554 = vadd.f32 %v492, %v553
        %555 = vmatmul.f32.gmra.mxu0 %v473
        %v556 = vpop.f32.mrf.mxu0
        %v557 = vadd.f32 %v492, %v556
        %558 = vdwg.mxu0
        %v559 = vmax.f32 %v512, 0.0
        %v560 = vmax.f32 %v515, 0.0
        %v561 = vmax.f32 %v518, 0.0
        %v562 = vmax.f32 %v521, 0.0
        %v563 = vmax.f32 %v524, 0.0
        %v564 = vmax.f32 %v527, 0.0
        %v565 = vmax.f32 %v530, 0.0
        %v566 = vmax.f32 %v533, 0.0
        %v567 = vmax.f32 %v536, 0.0
        %v568 = vmax.f32 %v539, 0.0
        %v569 = vmax.f32 %v542, 0.0
        %v570 = vmax.f32 %v545, 0.0
        %v571 = vmax.f32 %v548, 0.0
        %v572 = vmax.f32 %v551, 0.0
        %v573 = vmax.f32 %v554, 0.0
        %v574 = vmax.f32 %v557, 0.0
        %v575 = vmul.f32 %v559, %v426
        %v576 = vmul.f32 %v560, %v427
        %v577 = vmul.f32 %v561, %v428
        %v578 = vmul.f32 %v562, %v429
        %v579 = vmul.f32 %v563, %v430
        %v580 = vmul.f32 %v564, %v431
        %v581 = vmul.f32 %v565, %v432
        %v582 = vmul.f32 %v566, %v433
        %vm591 = vcmask 1040384
        %v592 = vrot.slane %v575, 7
        %v593 = vrot.slane %v576, 7
        %v594 = vsel %vm591, %v592, %v593
        %v595 = vrot.slane %v577, 7
        %v596 = vsel %vm591, %v593, %v595
        %v597 = vrot.slane %v578, 7
        %v598 = vsel %vm591, %v595, %v597
        %v599 = vrot.slane %v579, 7
        %v600 = vsel %vm591, %v597, %v599
        %v601 = vrot.slane %v580, 7
        %v602 = vsel %vm591, %v599, %v601
        %v603 = vrot.slane %v581, 7
        %v604 = vsel %vm591, %v601, %v603
        %v605 = vrot.slane %v582, 7
        %v606 = vsel %vm591, %v603, %v605
        %v615 = vsel %vm591, 0.0, %v592
        %v616 = vmul.f32 %v559, %v450
        %v617 = vmul.f32 %v560, %v451
        %v618 = vmul.f32 %v561, %v452
        %v619 = vmul.f32 %v562, %v453
        %v620 = vmul.f32 %v563, %v454
        %v621 = vmul.f32 %v564, %v455
        %v622 = vmul.f32 %v565, %v456
        %v623 = vmul.f32 %v566, %v457
        %vm632 = vcmask 1046528
        %v633 = vrot.slane %v616, 1
        %v634 = vrot.slane %v617, 1
        %v635 = vsel %vm632, %v633, %v634
        %v636 = vrot.slane %v618, 1
        %v637 = vsel %vm632, %v634, %v636
        %v638 = vrot.slane %v619, 1
        %v639 = vsel %vm632, %v636, %v638
        %v640 = vrot.slane %v620, 1
        %v641 = vsel %vm632, %v638, %v640
        %v642 = vrot.slane %v621, 1
        %v643 = vsel %vm632, %v640, %v642
        %v644 = vrot.slane %v622, 1
        %v645 = vsel %vm632, %v642, %v644
        %v646 = vrot.slane %v623, 1
        %v647 = vsel %vm632, %v644, %v646
        %v649 = vsel %vm632, %v646, 0.0
        %658 = vrot.lane.b32.xlu0 %v559, 32
        %v659 = vpop.permute.xlu0 %658
        %660 = vrot.lane.b32.xlu0 %v560, 32
        %v661 = vpop.permute.xlu0 %660
        %662 = vrot.lane.b32.xlu0 %v561, 32
        %v663 = vpop.permute.xlu0 %662
        %664 = vrot.lane.b32.xlu0 %v562, 32
        %v665 = vpop.permute.xlu0 %664
        %666 = vrot.lane.b32.xlu0 %v563, 32
        %v667 = vpop.permute.xlu0 %666
        %668 = vrot.lane.b32.xlu0 %v564, 32
        %v669 = vpop.permute.xlu0 %668
        %670 = vrot.lane.b32.xlu0 %v565, 32
        %v671 = vpop.permute.xlu0 %670
        %672 = vrot.lane.b32.xlu0 %v566, 32
        %v673 = vpop.permute.xlu0 %672
        %683 = vrot.lane.b32.xlu0 %v635, 64
        %v684 = vpop.permute.xlu0 %683
        %685 = vrot.lane.b32.xlu0 %v637, 64
        %v686 = vpop.permute.xlu0 %685
        %687 = vrot.lane.b32.xlu0 %v639, 64
        %v688 = vpop.permute.xlu0 %687
        %689 = vrot.lane.b32.xlu0 %v641, 64
        %v690 = vpop.permute.xlu0 %689
        %691 = vrot.lane.b32.xlu0 %v643, 64
        %v692 = vpop.permute.xlu0 %691
        %693 = vrot.lane.b32.xlu0 %v645, 64
        %v694 = vpop.permute.xlu0 %693
        %695 = vrot.lane.b32.xlu0 %v647, 64
        %v696 = vpop.permute.xlu0 %695
        %697 = vrot.lane.b32.xlu0 %v649, 64
        %v698 = vpop.permute.xlu0 %697
        %vm707 = vcmask 261120
        %v708 = vsel %vm707, %v615, %v659
        %v709 = vsel %vm707, %v594, %v661
        %v710 = vsel %vm707, %v596, %v663
        %v711 = vsel %vm707, %v598, %v665
        %v712 = vsel %vm707, %v600, %v667
        %v713 = vsel %vm707, %v602, %v669
        %v714 = vsel %vm707, %v604, %v671
        %v715 = vsel %vm707, %v606, %v673
        %vm716 = vcmask 523264
        %v717 = vsel %vm716, %v708, %v684
        %v718 = vsel %vm716, %v709, %v686
        %v719 = vsel %vm716, %v710, %v688
        %v720 = vsel %vm716, %v711, %v690
        %v721 = vsel %vm716, %v712, %v692
        %v722 = vsel %vm716, %v713, %v694
        %v723 = vsel %vm716, %v714, %v696
        %v724 = vsel %vm716, %v715, %v698
        %725 = vst.msk [vmem:[#allocation2 + $0x8] sm:$0xff] %vm302, %v717
        %726 = vst.msk [vmem:[#allocation2 + $0x10] sm:$0xff] %vm302, %v718
        %727 = vst.msk [vmem:[#allocation2 + $0x18] sm:$0xff] %vm302, %v719
        %728 = vst.msk [vmem:[#allocation2 + $0x20] sm:$0xff] %vm302, %v720
        %729 = vst.msk [vmem:[#allocation2 + $0x28] sm:$0xff] %vm302, %v721
        %730 = vst.msk [vmem:[#allocation2 + $0x30] sm:$0xff] %vm302, %v722
        %731 = vst.msk [vmem:[#allocation2 + $0x38] sm:$0xff] %vm302, %v723
        %732 = vst.msk [vmem:[#allocation2 + $0x40] sm:$0xff] %vm302, %v724
        %v733 = vld [vmem:[#allocation2] sm:$0xff]
        %v734 = vld [vmem:[#allocation2 + $0x8] sm:$0xff]
        %v735 = vld [vmem:[#allocation2 + $0x10] sm:$0xff]
        %v736 = vld [vmem:[#allocation2 + $0x18] sm:$0xff]
        %v737 = vld [vmem:[#allocation2 + $0x20] sm:$0xff]
        %v738 = vld [vmem:[#allocation2 + $0x28] sm:$0xff]
        %v739 = vld [vmem:[#allocation2 + $0x30] sm:$0xff]
        %v740 = vld [vmem:[#allocation2 + $0x38] sm:$0xff]
        %v741 = vld [vmem:[%s3] sm:$0xff]
        %v742 = vld [vmem:[%s3 + $0x8] sm:$0xff]
        %v743 = vld [vmem:[%s3 + $0x10] sm:$0xff]
        %v744 = vld [vmem:[%s3 + $0x18] sm:$0xff]
        %v745 = vld [vmem:[%s3 + $0x20] sm:$0xff]
        %v746 = vld [vmem:[%s3 + $0x28] sm:$0xff]
        %v747 = vld [vmem:[%s3 + $0x30] sm:$0xff]
        %v748 = vld [vmem:[%s3 + $0x38] sm:$0xff]
        %v749 = vld [vmem:[%s3 + $0x40] sm:$0xff]
        %v750 = vld [vmem:[%s3 + $0x48] sm:$0xff]
        %v751 = vld [vmem:[%s3 + $0x50] sm:$0xff]
        %v752 = vld [vmem:[%s3 + $0x58] sm:$0xff]
        %v753 = vld [vmem:[#allocation2 + $0x40] sm:$0xff]
        %s754 = scalar_lea.vmem %s3, 96
        %v755 = vld [vmem:[%s754] sm:$0xff]
        %v756 = vld [vmem:[%s754 + $0x8] sm:$0xff]
        %v757 = vld [vmem:[%s754 + $0x10] sm:$0xff]
        %v758 = vld [vmem:[%s754 + $0x18] sm:$0xff]
        %v759 = vld [vmem:[%s754 + $0x20] sm:$0xff]
        %v760 = vld [vmem:[%s754 + $0x28] sm:$0xff]
        %v761 = vld [vmem:[%s754 + $0x30] sm:$0xff]
        %v762 = vld [vmem:[%s754 + $0x38] sm:$0xff]
        %v763 = vld [vmem:[%s754 + $0x40] sm:$0xff]
        %v764 = vld [vmem:[%s754 + $0x48] sm:$0xff]
        %v765 = vld [vmem:[%s754 + $0x50] sm:$0xff]
        %v766 = vld [vmem:[%s754 + $0x58] sm:$0xff]
        %v768 = vsel %vm302, %v734, 0
        %v771 = vsel %vm302, %v735, 0
        %v774 = vsel %vm302, %v736, 0
        %v777 = vsel %vm302, %v737, 0
        %v780 = vsel %vm302, %v738, 0
        %v783 = vsel %vm302, %v739, 0
        %v786 = vsel %vm302, %v740, 0
        %v789 = vsel %vm302, %v753, 0
        %791 = vmatpush.msra.mxu0 0.0
        %792 = vmatpush.msra.mxu0 0.0
        %793 = vmatpush.msra.mxu0 0.0
        %794 = vmatpush.msra.mxu0 0.0
        %795 = vmatpush.msra.mxu0 %v766
        %796 = vmatpush.msra.mxu0 %v765
        %797 = vmatpush.msra.mxu0 %v764
        %798 = vmatpush.msra.mxu0 %v763
        %799 = vmatpush.msra.mxu0 %v762
        %800 = vmatpush.msra.mxu0 %v761
        %801 = vmatpush.msra.mxu0 %v760
        %802 = vmatpush.msra.mxu0 %v759
        %803 = vmatpush.msra.mxu0 %v758
        %804 = vmatpush.msra.mxu0 %v757
        %805 = vmatpush.msra.mxu0 %v756
        %806 = vmatpush.msra.mxu0 %v755
        %807 = vmatmul.f32.gmra.mxu0 %v768
        %v808 = vpop.f32.mrf.mxu0
        %v809 = vadd.f32 0.0, %v808
        %810 = vmatmul.f32.gmra.mxu0 %v771
        %v811 = vpop.f32.mrf.mxu0
        %v812 = vadd.f32 0.0, %v811
        %813 = vmatmul.f32.gmra.mxu0 %v774
        %v814 = vpop.f32.mrf.mxu0
        %v815 = vadd.f32 0.0, %v814
        %816 = vmatmul.f32.gmra.mxu0 %v777
        %v817 = vpop.f32.mrf.mxu0
        %v818 = vadd.f32 0.0, %v817
        %819 = vmatmul.f32.gmra.mxu0 %v780
        %v820 = vpop.f32.mrf.mxu0
        %v821 = vadd.f32 0.0, %v820
        %822 = vmatmul.f32.gmra.mxu0 %v783
        %v823 = vpop.f32.mrf.mxu0
        %v824 = vadd.f32 0.0, %v823
        %825 = vmatmul.f32.gmra.mxu0 %v786
        %v826 = vpop.f32.mrf.mxu0
        %v827 = vadd.f32 0.0, %v826
        %828 = vmatmul.f32.gmra.mxu0 %v789
        %v829 = vpop.f32.mrf.mxu0
        %v830 = vadd.f32 0.0, %v829
        %831 = vdwg.mxu0
        %v833 = vsel %vm302, %v733, 0
        %835 = vmatpush.msra.mxu0 0.0
        %836 = vmatpush.msra.mxu0 0.0
        %837 = vmatpush.msra.mxu0 0.0
        %838 = vmatpush.msra.mxu0 0.0
        %839 = vmatpush.msra.mxu0 %v752
        %840 = vmatpush.msra.mxu0 %v751
        %841 = vmatpush.msra.mxu0 %v750
        %842 = vmatpush.msra.mxu0 %v749
        %843 = vmatpush.msra.mxu0 %v748
        %844 = vmatpush.msra.mxu0 %v747
        %845 = vmatpush.msra.mxu0 %v746
        %846 = vmatpush.msra.mxu0 %v745
        %847 = vmatpush.msra.mxu0 %v744
        %848 = vmatpush.msra.mxu0 %v743
        %849 = vmatpush.msra.mxu0 %v742
        %850 = vmatpush.msra.mxu0 %v741
        %851 = vmatmul.f32.gmra.mxu0 %v833
        %v852 = vpop.f32.mrf.mxu0
        %v853 = vadd.f32 %v809, %v852
        %854 = vmatmul.f32.gmra.mxu0 %v768
        %v855 = vpop.f32.mrf.mxu0
        %v856 = vadd.f32 %v812, %v855
        %857 = vmatmul.f32.gmra.mxu0 %v771
        %v858 = vpop.f32.mrf.mxu0
        %v859 = vadd.f32 %v815, %v858
        %860 = vmatmul.f32.gmra.mxu0 %v774
        %v861 = vpop.f32.mrf.mxu0
        %v862 = vadd.f32 %v818, %v861
        %863 = vmatmul.f32.gmra.mxu0 %v777
        %v864 = vpop.f32.mrf.mxu0
        %v865 = vadd.f32 %v821, %v864
        %866 = vmatmul.f32.gmra.mxu0 %v780
        %v867 = vpop.f32.mrf.mxu0
        %v868 = vadd.f32 %v824, %v867
        %869 = vmatmul.f32.gmra.mxu0 %v783
        %v870 = vpop.f32.mrf.mxu0
        %v871 = vadd.f32 %v827, %v870
        %872 = vmatmul.f32.gmra.mxu0 %v786
        %v873 = vpop.f32.mrf.mxu0
        %v874 = vadd.f32 %v830, %v873
        %875 = vdwg.mxu0
        %v876 = vld [vmem:[#allocation2 + $0x10] sm:$0xff]
        %v877 = vld [vmem:[#allocation2 + $0x18] sm:$0xff]
        %v878 = vld [vmem:[#allocation2 + $0x20] sm:$0xff]
        %v879 = vld [vmem:[#allocation2 + $0x28] sm:$0xff]
        %v880 = vld [vmem:[#allocation2 + $0x30] sm:$0xff]
        %v881 = vld [vmem:[#allocation2 + $0x38] sm:$0xff]
        %v882 = vld [vmem:[#allocation2 + $0x40] sm:$0xff]
        %v883 = vld [vmem:[#allocation2 + $0x48] sm:$0xff]
        %s884 = scalar_lea.vmem %s3, 192
        %v885 = vld [vmem:[%s884] sm:$0xff]
        %v886 = vld [vmem:[%s884 + $0x8] sm:$0xff]
        %v887 = vld [vmem:[%s884 + $0x10] sm:$0xff]
        %v888 = vld [vmem:[%s884 + $0x18] sm:$0xff]
        %v889 = vld [vmem:[%s884 + $0x20] sm:$0xff]
        %v890 = vld [vmem:[%s884 + $0x28] sm:$0xff]
        %v891 = vld [vmem:[%s884 + $0x30] sm:$0xff]
        %v892 = vld [vmem:[%s884 + $0x38] sm:$0xff]
        %v893 = vld [vmem:[%s884 + $0x40] sm:$0xff]
        %v894 = vld [vmem:[%s884 + $0x48] sm:$0xff]
        %v895 = vld [vmem:[%s884 + $0x50] sm:$0xff]
        %v896 = vld [vmem:[%s884 + $0x58] sm:$0xff]
        %v898 = vsel %vm302, %v876, 0
        %v901 = vsel %vm302, %v877, 0
        %v904 = vsel %vm302, %v878, 0
        %v907 = vsel %vm302, %v879, 0
        %v910 = vsel %vm302, %v880, 0
        %v913 = vsel %vm302, %v881, 0
        %v916 = vsel %vm302, %v882, 0
        %v919 = vsel %vm302, %v883, 0
        %921 = vmatpush.msra.mxu0 0.0
        %922 = vmatpush.msra.mxu0 0.0
        %923 = vmatpush.msra.mxu0 0.0
        %924 = vmatpush.msra.mxu0 0.0
        %925 = vmatpush.msra.mxu0 %v896
        %926 = vmatpush.msra.mxu0 %v895
        %927 = vmatpush.msra.mxu0 %v894
        %928 = vmatpush.msra.mxu0 %v893
        %929 = vmatpush.msra.mxu0 %v892
        %930 = vmatpush.msra.mxu0 %v891
        %931 = vmatpush.msra.mxu0 %v890
        %932 = vmatpush.msra.mxu0 %v889
        %933 = vmatpush.msra.mxu0 %v888
        %934 = vmatpush.msra.mxu0 %v887
        %935 = vmatpush.msra.mxu0 %v886
        %936 = vmatpush.msra.mxu0 %v885
        %937 = vmatmul.f32.gmra.mxu0 %v898
        %v938 = vpop.f32.mrf.mxu0
        %v939 = vadd.f32 0.0, %v938
        %940 = vmatmul.f32.gmra.mxu0 %v901
        %v941 = vpop.f32.mrf.mxu0
        %v942 = vadd.f32 0.0, %v941
        %943 = vmatmul.f32.gmra.mxu0 %v904
        %v944 = vpop.f32.mrf.mxu0
        %v945 = vadd.f32 0.0, %v944
        %946 = vmatmul.f32.gmra.mxu0 %v907
        %v947 = vpop.f32.mrf.mxu0
        %v948 = vadd.f32 0.0, %v947
        %949 = vmatmul.f32.gmra.mxu0 %v910
        %v950 = vpop.f32.mrf.mxu0
        %v951 = vadd.f32 0.0, %v950
        %952 = vmatmul.f32.gmra.mxu0 %v913
        %v953 = vpop.f32.mrf.mxu0
        %v954 = vadd.f32 0.0, %v953
        %955 = vmatmul.f32.gmra.mxu0 %v916
        %v956 = vpop.f32.mrf.mxu0
        %v957 = vadd.f32 0.0, %v956
        %958 = vmatmul.f32.gmra.mxu0 %v919
        %v959 = vpop.f32.mrf.mxu0
        %v960 = vadd.f32 0.0, %v959
        %961 = vdwg.mxu0
        %v962 = vadd.f32 %v853, %v939
        %v963 = vadd.f32 %v856, %v942
        %v964 = vadd.f32 %v859, %v945
        %v965 = vadd.f32 %v862, %v948
        %v966 = vadd.f32 %v865, %v951
        %v967 = vadd.f32 %v868, %v954
        %v968 = vadd.f32 %v871, %v957
        %v969 = vadd.f32 %v874, %v960
        %v970 = vld [vmem:[%s4] sm:$0x1]
        %v972 = vperm.slane %v970, 0
        %v974 = vadd.f32 %v962, %v972
        %v975 = vadd.f32 %v963, %v972
        %v976 = vadd.f32 %v964, %v972
        %v977 = vadd.f32 %v965, %v972
        %v978 = vadd.f32 %v966, %v972
        %v979 = vadd.f32 %v967, %v972
        %v980 = vadd.f32 %v968, %v972
        %v981 = vadd.f32 %v969, %v972
        %v982 = vmax.f32 %v974, 0.0
        %v983 = vmax.f32 %v975, 0.0
        %v984 = vmax.f32 %v976, 0.0
        %v985 = vmax.f32 %v977, 0.0
        %v986 = vmax.f32 %v978, 0.0
        %v987 = vmax.f32 %v979, 0.0
        %v988 = vmax.f32 %v980, 0.0
        %v989 = vmax.f32 %v981, 0.0
        %v990 = vmul.f32 %v567, %v426
        %v991 = vmul.f32 %v568, %v427
        %v992 = vmul.f32 %v569, %v428
        %v993 = vmul.f32 %v570, %v429
        %v994 = vmul.f32 %v571, %v430
        %v995 = vmul.f32 %v572, %v431
        %v996 = vmul.f32 %v573, %v432
        %v997 = vmul.f32 %v574, %v433
        %v1006 = vrot.slane %v990, 7
        %v1007 = vrot.slane %v991, 7
        %v1008 = vsel %vm591, %v1006, %v1007
        %v1009 = vrot.slane %v992, 7
        %v1010 = vsel %vm591, %v1007, %v1009
        %v1011 = vrot.slane %v993, 7
        %v1012 = vsel %vm591, %v1009, %v1011
        %v1013 = vrot.slane %v994, 7
        %v1014 = vsel %vm591, %v1011, %v1013
        %v1015 = vrot.slane %v995, 7
        %v1016 = vsel %vm591, %v1013, %v1015
        %v1017 = vrot.slane %v996, 7
        %v1018 = vsel %vm591, %v1015, %v1017
        %v1019 = vrot.slane %v997, 7
        %v1020 = vsel %vm591, %v1017, %v1019
        %v1029 = vsel %vm591, 0.0, %v1006
        %v1030 = vmul.f32 %v567, %v450
        %v1031 = vmul.f32 %v568, %v451
        %v1032 = vmul.f32 %v569, %v452
        %v1033 = vmul.f32 %v570, %v453
        %v1034 = vmul.f32 %v571, %v454
        %v1035 = vmul.f32 %v572, %v455
        %v1036 = vmul.f32 %v573, %v456
        %v1037 = vmul.f32 %v574, %v457
        %v1046 = vrot.slane %v1030, 1
        %v1047 = vrot.slane %v1031, 1
        %v1048 = vsel %vm632, %v1046, %v1047
        %v1049 = vrot.slane %v1032, 1
        %v1050 = vsel %vm632, %v1047, %v1049
        %v1051 = vrot.slane %v1033, 1
        %v1052 = vsel %vm632, %v1049, %v1051
        %v1053 = vrot.slane %v1034, 1
        %v1054 = vsel %vm632, %v1051, %v1053
        %v1055 = vrot.slane %v1035, 1
        %v1056 = vsel %vm632, %v1053, %v1055
        %v1057 = vrot.slane %v1036, 1
        %v1058 = vsel %vm632, %v1055, %v1057
        %v1059 = vrot.slane %v1037, 1
        %v1060 = vsel %vm632, %v1057, %v1059
        %v1062 = vsel %vm632, %v1059, 0.0
        %1071 = vrot.lane.b32.xlu0 %v567, 32
        %v1072 = vpop.permute.xlu0 %1071
        %1073 = vrot.lane.b32.xlu0 %v568, 32
        %v1074 = vpop.permute.xlu0 %1073
        %1075 = vrot.lane.b32.xlu0 %v569, 32
        %v1076 = vpop.permute.xlu0 %1075
        %1077 = vrot.lane.b32.xlu0 %v570, 32
        %v1078 = vpop.permute.xlu0 %1077
        %1079 = vrot.lane.b32.xlu0 %v571, 32
        %v1080 = vpop.permute.xlu0 %1079
        %1081 = vrot.lane.b32.xlu0 %v572, 32
        %v1082 = vpop.permute.xlu0 %1081
        %1083 = vrot.lane.b32.xlu0 %v573, 32
        %v1084 = vpop.permute.xlu0 %1083
        %1085 = vrot.lane.b32.xlu0 %v574, 32
        %v1086 = vpop.permute.xlu0 %1085
        %1096 = vrot.lane.b32.xlu0 %v1048, 64
        %v1097 = vpop.permute.xlu0 %1096
        %1098 = vrot.lane.b32.xlu0 %v1050, 64
        %v1099 = vpop.permute.xlu0 %1098
        %1100 = vrot.lane.b32.xlu0 %v1052, 64
        %v1101 = vpop.permute.xlu0 %1100
        %1102 = vrot.lane.b32.xlu0 %v1054, 64
        %v1103 = vpop.permute.xlu0 %1102
        %1104 = vrot.lane.b32.xlu0 %v1056, 64
        %v1105 = vpop.permute.xlu0 %1104
        %1106 = vrot.lane.b32.xlu0 %v1058, 64
        %v1107 = vpop.permute.xlu0 %1106
        %1108 = vrot.lane.b32.xlu0 %v1060, 64
        %v1109 = vpop.permute.xlu0 %1108
        %1110 = vrot.lane.b32.xlu0 %v1062, 64
        %v1111 = vpop.permute.xlu0 %1110
        %v1120 = vsel %vm707, %v1029, %v1072
        %v1121 = vsel %vm707, %v1008, %v1074
        %v1122 = vsel %vm707, %v1010, %v1076
        %v1123 = vsel %vm707, %v1012, %v1078
        %v1124 = vsel %vm707, %v1014, %v1080
        %v1125 = vsel %vm707, %v1016, %v1082
        %v1126 = vsel %vm707, %v1018, %v1084
        %v1127 = vsel %vm707, %v1020, %v1086
        %v1128 = vsel %vm716, %v1120, %v1097
        %v1129 = vsel %vm716, %v1121, %v1099
        %v1130 = vsel %vm716, %v1122, %v1101
        %v1131 = vsel %vm716, %v1123, %v1103
        %v1132 = vsel %vm716, %v1124, %v1105
        %v1133 = vsel %vm716, %v1125, %v1107
        %v1134 = vsel %vm716, %v1126, %v1109
        %v1135 = vsel %vm716, %v1127, %v1111
        %1136 = vst.msk [vmem:[#allocation2 + $0x8] sm:$0xff] %vm302, %v1128
        %1137 = vst.msk [vmem:[#allocation2 + $0x10] sm:$0xff] %vm302, %v1129
        %1138 = vst.msk [vmem:[#allocation2 + $0x18] sm:$0xff] %vm302, %v1130
        %1139 = vst.msk [vmem:[#allocation2 + $0x20] sm:$0xff] %vm302, %v1131
        %1140 = vst.msk [vmem:[#allocation2 + $0x28] sm:$0xff] %vm302, %v1132
        %1141 = vst.msk [vmem:[#allocation2 + $0x30] sm:$0xff] %vm302, %v1133
        %1142 = vst.msk [vmem:[#allocation2 + $0x38] sm:$0xff] %vm302, %v1134
        %1143 = vst.msk [vmem:[#allocation2 + $0x40] sm:$0xff] %vm302, %v1135
        %v1144 = vld [vmem:[#allocation2] sm:$0xff]
        %v1145 = vld [vmem:[#allocation2 + $0x8] sm:$0xff]
        %v1146 = vld [vmem:[#allocation2 + $0x10] sm:$0xff]
        %v1147 = vld [vmem:[#allocation2 + $0x18] sm:$0xff]
        %v1148 = vld [vmem:[#allocation2 + $0x20] sm:$0xff]
        %v1149 = vld [vmem:[#allocation2 + $0x28] sm:$0xff]
        %v1150 = vld [vmem:[#allocation2 + $0x30] sm:$0xff]
        %v1151 = vld [vmem:[#allocation2 + $0x38] sm:$0xff]
        %v1152 = vld [vmem:[%s3] sm:$0xff]
        %v1153 = vld [vmem:[%s3 + $0x8] sm:$0xff]
        %v1154 = vld [vmem:[%s3 + $0x10] sm:$0xff]
        %v1155 = vld [vmem:[%s3 + $0x18] sm:$0xff]
        %v1156 = vld [vmem:[%s3 + $0x20] sm:$0xff]
        %v1157 = vld [vmem:[%s3 + $0x28] sm:$0xff]
        %v1158 = vld [vmem:[%s3 + $0x30] sm:$0xff]
        %v1159 = vld [vmem:[%s3 + $0x38] sm:$0xff]
        %v1160 = vld [vmem:[%s3 + $0x40] sm:$0xff]
        %v1161 = vld [vmem:[%s3 + $0x48] sm:$0xff]
        %v1162 = vld [vmem:[%s3 + $0x50] sm:$0xff]
        %v1163 = vld [vmem:[%s3 + $0x58] sm:$0xff]
        %v1164 = vld [vmem:[#allocation2 + $0x40] sm:$0xff]
        %v1165 = vld [vmem:[%s754] sm:$0xff]
        %v1166 = vld [vmem:[%s754 + $0x8] sm:$0xff]
        %v1167 = vld [vmem:[%s754 + $0x10] sm:$0xff]
        %v1168 = vld [vmem:[%s754 + $0x18] sm:$0xff]
        %v1169 = vld [vmem:[%s754 + $0x20] sm:$0xff]
        %v1170 = vld [vmem:[%s754 + $0x28] sm:$0xff]
        %v1171 = vld [vmem:[%s754 + $0x30] sm:$0xff]
        %v1172 = vld [vmem:[%s754 + $0x38] sm:$0xff]
        %v1173 = vld [vmem:[%s754 + $0x40] sm:$0xff]
        %v1174 = vld [vmem:[%s754 + $0x48] sm:$0xff]
        %v1175 = vld [vmem:[%s754 + $0x50] sm:$0xff]
        %v1176 = vld [vmem:[%s754 + $0x58] sm:$0xff]
        %v1178 = vsel %vm302, %v1145, 0
        %v1181 = vsel %vm302, %v1146, 0
        %v1184 = vsel %vm302, %v1147, 0
        %v1187 = vsel %vm302, %v1148, 0
        %v1190 = vsel %vm302, %v1149, 0
        %v1193 = vsel %vm302, %v1150, 0
        %v1196 = vsel %vm302, %v1151, 0
        %v1199 = vsel %vm302, %v1164, 0
        %1201 = vmatpush.msra.mxu0 0.0
        %1202 = vmatpush.msra.mxu0 0.0
        %1203 = vmatpush.msra.mxu0 0.0
        %1204 = vmatpush.msra.mxu0 0.0
        %1205 = vmatpush.msra.mxu0 %v1176
        %1206 = vmatpush.msra.mxu0 %v1175
        %1207 = vmatpush.msra.mxu0 %v1174
        %1208 = vmatpush.msra.mxu0 %v1173
        %1209 = vmatpush.msra.mxu0 %v1172
        %1210 = vmatpush.msra.mxu0 %v1171
        %1211 = vmatpush.msra.mxu0 %v1170
        %1212 = vmatpush.msra.mxu0 %v1169
        %1213 = vmatpush.msra.mxu0 %v1168
        %1214 = vmatpush.msra.mxu0 %v1167
        %1215 = vmatpush.msra.mxu0 %v1166
        %1216 = vmatpush.msra.mxu0 %v1165
        %1217 = vmatmul.f32.gmra.mxu0 %v1178
        %v1218 = vpop.f32.mrf.mxu0
        %v1219 = vadd.f32 0.0, %v1218
        %1220 = vmatmul.f32.gmra.mxu0 %v1181
        %v1221 = vpop.f32.mrf.mxu0
        %v1222 = vadd.f32 0.0, %v1221
        %1223 = vmatmul.f32.gmra.mxu0 %v1184
        %v1224 = vpop.f32.mrf.mxu0
        %v1225 = vadd.f32 0.0, %v1224
        %1226 = vmatmul.f32.gmra.mxu0 %v1187
        %v1227 = vpop.f32.mrf.mxu0
        %v1228 = vadd.f32 0.0, %v1227
        %1229 = vmatmul.f32.gmra.mxu0 %v1190
        %v1230 = vpop.f32.mrf.mxu0
        %v1231 = vadd.f32 0.0, %v1230
        %1232 = vmatmul.f32.gmra.mxu0 %v1193
        %v1233 = vpop.f32.mrf.mxu0
        %v1234 = vadd.f32 0.0, %v1233
        %1235 = vmatmul.f32.gmra.mxu0 %v1196
        %v1236 = vpop.f32.mrf.mxu0
        %v1237 = vadd.f32 0.0, %v1236
        %1238 = vmatmul.f32.gmra.mxu0 %v1199
        %v1239 = vpop.f32.mrf.mxu0
        %v1240 = vadd.f32 0.0, %v1239
        %1241 = vdwg.mxu0
        %v1243 = vsel %vm302, %v1144, 0
        %1245 = vmatpush.msra.mxu0 0.0
        %1246 = vmatpush.msra.mxu0 0.0
        %1247 = vmatpush.msra.mxu0 0.0
        %1248 = vmatpush.msra.mxu0 0.0
        %1249 = vmatpush.msra.mxu0 %v1163
        %1250 = vmatpush.msra.mxu0 %v1162
        %1251 = vmatpush.msra.mxu0 %v1161
        %1252 = vmatpush.msra.mxu0 %v1160
        %1253 = vmatpush.msra.mxu0 %v1159
        %1254 = vmatpush.msra.mxu0 %v1158
        %1255 = vmatpush.msra.mxu0 %v1157
        %1256 = vmatpush.msra.mxu0 %v1156
        %1257 = vmatpush.msra.mxu0 %v1155
        %1258 = vmatpush.msra.mxu0 %v1154
        %1259 = vmatpush.msra.mxu0 %v1153
        %1260 = vmatpush.msra.mxu0 %v1152
        %1261 = vmatmul.f32.gmra.mxu0 %v1243
        %v1262 = vpop.f32.mrf.mxu0
        %v1263 = vadd.f32 %v1219, %v1262
        %1264 = vmatmul.f32.gmra.mxu0 %v1178
        %v1265 = vpop.f32.mrf.mxu0
        %v1266 = vadd.f32 %v1222, %v1265
        %1267 = vmatmul.f32.gmra.mxu0 %v1181
        %v1268 = vpop.f32.mrf.mxu0
        %v1269 = vadd.f32 %v1225, %v1268
        %1270 = vmatmul.f32.gmra.mxu0 %v1184
        %v1271 = vpop.f32.mrf.mxu0
        %v1272 = vadd.f32 %v1228, %v1271
        %1273 = vmatmul.f32.gmra.mxu0 %v1187
        %v1274 = vpop.f32.mrf.mxu0
        %v1275 = vadd.f32 %v1231, %v1274
        %1276 = vmatmul.f32.gmra.mxu0 %v1190
        %v1277 = vpop.f32.mrf.mxu0
        %v1278 = vadd.f32 %v1234, %v1277
        %1279 = vmatmul.f32.gmra.mxu0 %v1193
        %v1280 = vpop.f32.mrf.mxu0
        %v1281 = vadd.f32 %v1237, %v1280
        %1282 = vmatmul.f32.gmra.mxu0 %v1196
        %v1283 = vpop.f32.mrf.mxu0
        %v1284 = vadd.f32 %v1240, %v1283
        %1285 = vdwg.mxu0
        %v1286 = vld [vmem:[#allocation2 + $0x10] sm:$0xff]
        %v1287 = vld [vmem:[#allocation2 + $0x18] sm:$0xff]
        %v1288 = vld [vmem:[#allocation2 + $0x20] sm:$0xff]
        %v1289 = vld [vmem:[#allocation2 + $0x28] sm:$0xff]
        %v1290 = vld [vmem:[#allocation2 + $0x30] sm:$0xff]
        %v1291 = vld [vmem:[#allocation2 + $0x38] sm:$0xff]
        %v1292 = vld [vmem:[#allocation2 + $0x40] sm:$0xff]
        %v1293 = vld [vmem:[#allocation2 + $0x48] sm:$0xff]
        %v1294 = vld [vmem:[%s884] sm:$0xff]
        %v1295 = vld [vmem:[%s884 + $0x8] sm:$0xff]
        %v1296 = vld [vmem:[%s884 + $0x10] sm:$0xff]
        %v1297 = vld [vmem:[%s884 + $0x18] sm:$0xff]
        %v1298 = vld [vmem:[%s884 + $0x20] sm:$0xff]
        %v1299 = vld [vmem:[%s884 + $0x28] sm:$0xff]
        %v1300 = vld [vmem:[%s884 + $0x30] sm:$0xff]
        %v1301 = vld [vmem:[%s884 + $0x38] sm:$0xff]
        %v1302 = vld [vmem:[%s884 + $0x40] sm:$0xff]
        %v1303 = vld [vmem:[%s884 + $0x48] sm:$0xff]
        %v1304 = vld [vmem:[%s884 + $0x50] sm:$0xff]
        %v1305 = vld [vmem:[%s884 + $0x58] sm:$0xff]
        %v1307 = vsel %vm302, %v1286, 0
        %v1310 = vsel %vm302, %v1287, 0
        %v1313 = vsel %vm302, %v1288, 0
        %v1316 = vsel %vm302, %v1289, 0
        %v1319 = vsel %vm302, %v1290, 0
        %v1322 = vsel %vm302, %v1291, 0
        %v1325 = vsel %vm302, %v1292, 0
        %v1328 = vsel %vm302, %v1293, 0
        %1330 = vmatpush.msra.mxu0 0.0
        %1331 = vmatpush.msra.mxu0 0.0
        %1332 = vmatpush.msra.mxu0 0.0
        %1333 = vmatpush.msra.mxu0 0.0
        %1334 = vmatpush.msra.mxu0 %v1305
        %1335 = vmatpush.msra.mxu0 %v1304
        %1336 = vmatpush.msra.mxu0 %v1303
        %1337 = vmatpush.msra.mxu0 %v1302
        %1338 = vmatpush.msra.mxu0 %v1301
        %1339 = vmatpush.msra.mxu0 %v1300
        %1340 = vmatpush.msra.mxu0 %v1299
        %1341 = vmatpush.msra.mxu0 %v1298
        %1342 = vmatpush.msra.mxu0 %v1297
        %1343 = vmatpush.msra.mxu0 %v1296
        %1344 = vmatpush.msra.mxu0 %v1295
        %1345 = vmatpush.msra.mxu0 %v1294
        %1346 = vmatmul.f32.gmra.mxu0 %v1307
        %v1347 = vpop.f32.mrf.mxu0
        %v1348 = vadd.f32 0.0, %v1347
        %1349 = vmatmul.f32.gmra.mxu0 %v1310
        %v1350 = vpop.f32.mrf.mxu0
        %v1351 = vadd.f32 0.0, %v1350
        %1352 = vmatmul.f32.gmra.mxu0 %v1313
        %v1353 = vpop.f32.mrf.mxu0
        %v1354 = vadd.f32 0.0, %v1353
        %1355 = vmatmul.f32.gmra.mxu0 %v1316
        %v1356 = vpop.f32.mrf.mxu0
        %v1357 = vadd.f32 0.0, %v1356
        %1358 = vmatmul.f32.gmra.mxu0 %v1319
        %v1359 = vpop.f32.mrf.mxu0
        %v1360 = vadd.f32 0.0, %v1359
        %1361 = vmatmul.f32.gmra.mxu0 %v1322
        %v1362 = vpop.f32.mrf.mxu0
        %v1363 = vadd.f32 0.0, %v1362
        %1364 = vmatmul.f32.gmra.mxu0 %v1325
        %v1365 = vpop.f32.mrf.mxu0
        %v1366 = vadd.f32 0.0, %v1365
        %1367 = vmatmul.f32.gmra.mxu0 %v1328
        %v1368 = vpop.f32.mrf.mxu0
        %v1369 = vadd.f32 0.0, %v1368
        %1370 = vdwg.mxu0
        %v1371 = vadd.f32 %v1263, %v1348
        %v1372 = vadd.f32 %v1266, %v1351
        %v1373 = vadd.f32 %v1269, %v1354
        %v1374 = vadd.f32 %v1272, %v1357
        %v1375 = vadd.f32 %v1275, %v1360
        %v1376 = vadd.f32 %v1278, %v1363
        %v1377 = vadd.f32 %v1281, %v1366
        %v1378 = vadd.f32 %v1284, %v1369
        %v1379 = vld [vmem:[%s4] sm:$0x1]
        %v1381 = vperm.slane %v1379, 0
        %v1383 = vadd.f32 %v1371, %v1381
        %v1384 = vadd.f32 %v1372, %v1381
        %v1385 = vadd.f32 %v1373, %v1381
        %v1386 = vadd.f32 %v1374, %v1381
        %v1387 = vadd.f32 %v1375, %v1381
        %v1388 = vadd.f32 %v1376, %v1381
        %v1389 = vadd.f32 %v1377, %v1381
        %v1390 = vadd.f32 %v1378, %v1381
        %v1391 = vmax.f32 %v1383, 0.0
        %v1392 = vmax.f32 %v1384, 0.0
        %v1393 = vmax.f32 %v1385, 0.0
        %v1394 = vmax.f32 %v1386, 0.0
        %v1395 = vmax.f32 %v1387, 0.0
        %v1396 = vmax.f32 %v1388, 0.0
        %v1397 = vmax.f32 %v1389, 0.0
        %v1398 = vmax.f32 %v1390, 0.0
        %v1399 = vld [vmem:[%s5] sm:$0xff]
        %v1400 = vld [vmem:[%s5 + $0x8] sm:$0xff]
        %v1401 = vld [vmem:[%s5 + $0x10] sm:$0xff]
        %v1402 = vld [vmem:[%s5 + $0x18] sm:$0xff]
        %v1403 = vld [vmem:[%s268] sm:$0xff]
        %v1404 = vld [vmem:[%s268 + $0x8] sm:$0xff]
        %v1405 = vld [vmem:[%s268 + $0x10] sm:$0xff]
        %v1406 = vld [vmem:[%s268 + $0x18] sm:$0xff]
        %v1407 = vld [vmem:[%s268 + $0x20] sm:$0xff]
        %v1408 = vld [vmem:[%s268 + $0x28] sm:$0xff]
        %v1409 = vld [vmem:[%s268 + $0x30] sm:$0xff]
        %v1410 = vld [vmem:[%s268 + $0x38] sm:$0xff]
        %v1411 = vld [vmem:[%s268 + $0x40] sm:$0xff]
        %v1412 = vld [vmem:[%s268 + $0x48] sm:$0xff]
        %v1413 = vld [vmem:[%s268 + $0x50] sm:$0xff]
        %v1414 = vld [vmem:[%s268 + $0x58] sm:$0xff]
        %v1415 = vld [vmem:[%s268 + $0x60] sm:$0xff]
        %v1416 = vld [vmem:[%s268 + $0x68] sm:$0xff]
        %v1417 = vld [vmem:[%s268 + $0x70] sm:$0xff]
        %v1418 = vld [vmem:[%s268 + $0x78] sm:$0xff]
        %v1419 = vld [vmem:[%s6] sm:$0x1]
        %v1421 = vperm.slane %v1419, 0
        %v1424 = vsel %vm707, %v982, 0
        %v1427 = vsel %vm707, %v983, 0
        %v1430 = vsel %vm707, %v984, 0
        %v1433 = vsel %vm707, %v985, 0
        %v1436 = vsel %vm707, %v986, 0
        %v1439 = vsel %vm707, %v987, 0
        %v1442 = vsel %vm707, %v988, 0
        %v1445 = vsel %vm707, %v989, 0
        %v1448 = vsel %vm707, %v1391, 0
        %v1451 = vsel %vm707, %v1392, 0
        %v1454 = vsel %vm707, %v1393, 0
        %v1457 = vsel %vm707, %v1394, 0
        %v1460 = vsel %vm707, %v1395, 0
        %v1463 = vsel %vm707, %v1396, 0
        %v1466 = vsel %vm707, %v1397, 0
        %v1469 = vsel %vm707, %v1398, 0
        %1471 = vmatpush.msra.mxu0 0.0
        %1472 = vmatpush.msra.mxu0 0.0
        %1473 = vmatpush.msra.mxu0 0.0
        %1474 = vmatpush.msra.mxu0 0.0
        %1475 = vmatpush.msra.mxu0 0.0
        %1476 = vmatpush.msra.mxu0 0.0
        %1477 = vmatpush.msra.mxu0 0.0
        %1478 = vmatpush.msra.mxu0 0.0
        %1479 = vmatpush.msra.mxu0 0.0
        %1480 = vmatpush.msra.mxu0 0.0
        %1481 = vmatpush.msra.mxu0 0.0
        %1482 = vmatpush.msra.mxu0 0.0
        %1483 = vmatpush.msra.mxu0 %v1402
        %1484 = vmatpush.msra.mxu0 %v1401
        %1485 = vmatpush.msra.mxu0 %v1400
        %1486 = vmatpush.msra.mxu0 %v1399
        %1487 = vmatmul.f32.gmra.mxu0 %v1424
        %v1488 = vpop.f32.mrf.mxu0
        %v1489 = vadd.f32 %v1421, %v1488
        %1490 = vmatmul.f32.gmra.mxu0 %v1427
        %v1491 = vpop.f32.mrf.mxu0
        %v1492 = vadd.f32 %v1421, %v1491
        %1493 = vmatmul.f32.gmra.mxu0 %v1430
        %v1494 = vpop.f32.mrf.mxu0
        %v1495 = vadd.f32 %v1421, %v1494
        %1496 = vmatmul.f32.gmra.mxu0 %v1433
        %v1497 = vpop.f32.mrf.mxu0
        %v1498 = vadd.f32 %v1421, %v1497
        %1499 = vmatmul.f32.gmra.mxu0 %v1436
        %v1500 = vpop.f32.mrf.mxu0
        %v1501 = vadd.f32 %v1421, %v1500
        %1502 = vmatmul.f32.gmra.mxu0 %v1439
        %v1503 = vpop.f32.mrf.mxu0
        %v1504 = vadd.f32 %v1421, %v1503
        %1505 = vmatmul.f32.gmra.mxu0 %v1442
        %v1506 = vpop.f32.mrf.mxu0
        %v1507 = vadd.f32 %v1421, %v1506
        %1508 = vmatmul.f32.gmra.mxu0 %v1445
        %v1509 = vpop.f32.mrf.mxu0
        %v1510 = vadd.f32 %v1421, %v1509
        %1511 = vmatmul.f32.gmra.mxu0 %v1448
        %v1512 = vpop.f32.mrf.mxu0
        %v1513 = vadd.f32 %v1421, %v1512
        %1514 = vmatmul.f32.gmra.mxu0 %v1451
        %v1515 = vpop.f32.mrf.mxu0
        %v1516 = vadd.f32 %v1421, %v1515
        %1517 = vmatmul.f32.gmra.mxu0 %v1454
        %v1518 = vpop.f32.mrf.mxu0
        %v1519 = vadd.f32 %v1421, %v1518
        %1520 = vmatmul.f32.gmra.mxu0 %v1457
        %v1521 = vpop.f32.mrf.mxu0
        %v1522 = vadd.f32 %v1421, %v1521
        %1523 = vmatmul.f32.gmra.mxu0 %v1460
        %v1524 = vpop.f32.mrf.mxu0
        %v1525 = vadd.f32 %v1421, %v1524
        %1526 = vmatmul.f32.gmra.mxu0 %v1463
        %v1527 = vpop.f32.mrf.mxu0
        %v1528 = vadd.f32 %v1421, %v1527
        %1529 = vmatmul.f32.gmra.mxu0 %v1466
        %v1530 = vpop.f32.mrf.mxu0
        %v1531 = vadd.f32 %v1421, %v1530
        %1532 = vmatmul.f32.gmra.mxu0 %v1469
        %v1533 = vpop.f32.mrf.mxu0
        %v1534 = vadd.f32 %v1421, %v1533
        %1535 = vdwg.mxu0
        %v1536 = vadd.f32 %v1489, %v1403
        %v1537 = vadd.f32 %v1492, %v1404
        %v1538 = vadd.f32 %v1495, %v1405
        %v1539 = vadd.f32 %v1498, %v1406
        %v1540 = vadd.f32 %v1501, %v1407
        %v1541 = vadd.f32 %v1504, %v1408
        %v1542 = vadd.f32 %v1507, %v1409
        %v1543 = vadd.f32 %v1510, %v1410
        %v1544 = vadd.f32 %v1513, %v1411
        %v1545 = vadd.f32 %v1516, %v1412
        %v1546 = vadd.f32 %v1519, %v1413
        %v1547 = vadd.f32 %v1522, %v1414
        %v1548 = vadd.f32 %v1525, %v1415
        %v1549 = vadd.f32 %v1528, %v1416
        %v1550 = vadd.f32 %v1531, %v1417
        %v1551 = vadd.f32 %v1534, %v1418
        %v1552 = vmax.f32 %v1536, 0.0
        %v1553 = vmax.f32 %v1537, 0.0
        %v1554 = vmax.f32 %v1538, 0.0
        %v1555 = vmax.f32 %v1539, 0.0
        %v1556 = vmax.f32 %v1540, 0.0
        %v1557 = vmax.f32 %v1541, 0.0
        %v1558 = vmax.f32 %v1542, 0.0
        %v1559 = vmax.f32 %v1543, 0.0
        %v1560 = vmax.f32 %v1544, 0.0
        %v1561 = vmax.f32 %v1545, 0.0
        %v1562 = vmax.f32 %v1546, 0.0
        %v1563 = vmax.f32 %v1547, 0.0
        %v1564 = vmax.f32 %v1548, 0.0
        %v1565 = vmax.f32 %v1549, 0.0
        %v1566 = vmax.f32 %v1550, 0.0
        %v1567 = vmax.f32 %v1551, 0.0
        %1568 = vst [vmem:[%s299] sm:$0xff] %v1552
        %1569 = vst [vmem:[%s299 + $0x8] sm:$0xff] %v1553
        %1570 = vst [vmem:[%s299 + $0x10] sm:$0xff] %v1554
        %1571 = vst [vmem:[%s299 + $0x18] sm:$0xff] %v1555
        %1572 = vst [vmem:[%s299 + $0x20] sm:$0xff] %v1556
        %1573 = vst [vmem:[%s299 + $0x28] sm:$0xff] %v1557
        %1574 = vst [vmem:[%s299 + $0x30] sm:$0xff] %v1558
        %1575 = vst [vmem:[%s299 + $0x38] sm:$0xff] %v1559
        %1576 = vst [vmem:[%s299 + $0x40] sm:$0xff] %v1560
        %1577 = vst [vmem:[%s299 + $0x48] sm:$0xff] %v1561
        %1578 = vst [vmem:[%s299 + $0x50] sm:$0xff] %v1562
        %1579 = vst [vmem:[%s299 + $0x58] sm:$0xff] %v1563
        %1580 = vst [vmem:[%s299 + $0x60] sm:$0xff] %v1564
        %1581 = vst [vmem:[%s299 + $0x68] sm:$0xff] %v1565
        %1582 = vst [vmem:[%s299 + $0x70] sm:$0xff] %v1566
        %1583 = vst [vmem:[%s299 + $0x78] sm:$0xff] %v1567
        %s1584 = sand.u32 %s184, 1
        %s1585 = scalar_lea.sflag [#allocation5], %s1584
        %s1586 = sand.u32 %s184, 1
        %s1587 = smul.addr %s1586, 128
        %s1588 = scalar_lea.vmem [#allocation6], %s1587
        // Predicated region
        $region53: #{tpu_custom_call.1} parent=47 // pred_check
          %p1589 = pneg %p194
        $region54: #{tpu_custom_call.1} parent=47 // pred_check_branch
          %1591 = sbr.rel (%p1589) target = $region56
        $region55: #{tpu_custom_call.1} parent=47 // pred_region
          %s1592 = smul.u32 2, %s24
          %1594 = vsyncadd %s1585, 0
          %s1595 = smul.addr %s1592, 8
          %s1596 = smul.addr %s1595, 8
          %s1597 = scalar_lea.hbm %s7, %s1596
          %s1598 = sshll.u32 %s1588, 4
          %s1599 = int_to_ptr.vmem [resolvable:$true] %s1598
          %s1600 = sshll.u32 %s1597, 4
          %s1601 = int_to_ptr.hbm [resolvable:$true] %s1600
          %1606 = dma.vmem_to_hbm [thread:$0]  %s1599, 2048, %s1601, %s1585, 128, 128, 8
        $region56: #{tpu_custom_call.1} parent=47 // pred_fallthru
          _
      $region48: #{tpu_custom_call.1} parent=5 // pred_fallthru
        _
      %p1607 = scmp.le.s32.totalorder 2, %s19
      // Predicated region
      $region57: #{tpu_custom_call.1} parent=5 // pred_check
        %p1608 = pneg %p1607
      $region58: #{tpu_custom_call.1} parent=5 // pred_check_branch
        %1610 = sbr.rel (%p1608) target = $region60
      $region59: #{tpu_custom_call.1} parent=5 // pred_region
        %s1611 = ssub.s32 %s19, 2
        // Predicated region
        $region61: #{tpu_custom_call.1} parent=59 // pred_check
          %p1612 = pneg %p200
        $region62: #{tpu_custom_call.1} parent=59 // pred_check_branch
          %1614 = sbr.rel (%p1612) target = $region64
        $region63: #{tpu_custom_call.1} parent=59 // pred_region
          %s1615 = sand.u32 %s185, 1
          %s1616 = scalar_lea.sflag [#allocation5], %s1615
          %s1617 = sand.u32 %s185, 1
          %s1618 = smul.addr %s1617, 128
          %s1619 = scalar_lea.vmem [#allocation6], %s1618
          %1621 = dma.done %s1616, 2048
        $region64: #{tpu_custom_call.1} parent=59 // pred_fallthru
          _
      $region60: #{tpu_custom_call.1} parent=5 // pred_fallthru
        _
    $region6: #{tpu_custom_call.1} parent=1 // loop_footer
      %s23 = sadd.s32 1, %s19
    $region7: #{tpu_custom_call.1} parent=1 // loop_footer_branch
      %18 = sbr.rel target = $region3
    $region8: #{tpu_custom_call.1} parent=1 // loop_exit
      _
    %1622 = vsyncpa [#allocation4], 1
    %s1623 = scalar_lea.sflag [#allocation4], 1
    %1624 = vsyncpa %s1623, 1
    %1625 = vsyncpa [#allocation5], 1
    %s1626 = scalar_lea.sflag [#allocation5], 1
    %1627 = vsyncpa %s1626, 1

</llo_original>
